<compile_context>
chip_gen: v7x
topology: tpu7x:2x2x1
jax: 0.10.0
libtpu: 0.0.40
codegen_flags: <defaults>
</compile_context>

<pallas_src>
import jax
import jax.numpy as jnp
from jax.experimental import pallas as pl
from jax.experimental.pallas import tpu as pltpu

EPS = 1e-5
LANE = 128


def _ceil_to(x, m):
    return ((x + m - 1) // m) * m


def _pad_last2(a, r, c):
    return jnp.pad(a, [(0, 0)] * (a.ndim - 2)
                   + [(0, r - a.shape[-2]), (0, c - a.shape[-1])])


def _pad_vec(v, n):
    return jnp.pad(v, (0, n - v.shape[0]))


# ---------------- Pallas kernels ----------------

def _make_conv_kernel(stride, Ho, Wo, Cin_p, Cout_p, fuse_bn_relu, pad_output):
    """Whole-image 3x3 conv; optional fused BN+ReLU on the input; bf16 z out + BN partial stats."""
    nph = stride * stride
    M = Ho * Wo

    def kernel(*refs):
        ph_refs = refs[:nph]
        idx = nph
        if fuse_bn_relu:
            ss_ref, mask_ref = refs[idx], refs[idx + 1]
            idx += 2
        w_ref, zo_ref, st_ref = refs[idx], refs[idx + 1], refs[idx + 2]

        if fuse_bn_relu:
            # BN1 scale/shift + ReLU fused into this conv's input path; the multiplicative mask
            # keeps the spatial zero border zero after the affine+relu.
            zp = ph_refs[0][0].astype(jnp.float32)
            y = jnp.maximum(zp * ss_ref[0:1, :] + ss_ref[1:2, :], 0.0) * mask_ref[...]
            planes = [y.astype(jnp.bfloat16)]
        else:
            planes = [r[0] for r in ph_refs]

        acc = jnp.zeros((M, Cout_p), jnp.float32)
        for kh in range(3):
            for kw in range(3):
                ph, pw = kh % stride, kw % stride
                qh, qw = kh // stride, kw // stride
                tap = planes[ph * stride + pw][qh:qh + Ho, qw:qw + Wo, :]
                acc = acc + jnp.dot(tap.reshape(M, Cin_p), w_ref[kh * 3 + kw],
                                    preferred_element_type=jnp.float32)

        # Per-batch partial BatchNorm statistics (sum, sum^2) from the f32 accumulator.
        # No conv bias here: a per-channel bias is exactly cancelled by the following BatchNorm.
        st_ref[0] = jnp.zeros((8, Cout_p), jnp.float32)
        st_ref[0, 0:1, :] = jnp.sum(acc, axis=0, keepdims=True)
        st_ref[0, 1:2, :] = jnp.sum(acc * acc, axis=0, keepdims=True)

        z = acc.reshape(Ho, Wo, Cout_p).astype(zo_ref.dtype)
        if pad_output:
            # emit z already spatially zero-padded so the next conv needs no wrapper-side pad
            zo_ref[...] = jnp.zeros_like(zo_ref)
            zo_ref[0, 1:1 + Ho, 1:1 + Wo, :] = z
        else:
            zo_ref[0] = z

    return kernel


def _bn_add_relu_kernel(z_ref, ss_ref, sc_ref, o_ref):
    # BN2 (folded scale/shift) + identity shortcut + ReLU
    o_ref[...] = jnp.maximum(
        z_ref[...].astype(jnp.float32) * ss_ref[0:1, :] + ss_ref[1:2, :]
        + sc_ref[...].astype(jnp.float32), 0.0)


def _bn_add_relu_1x1_kernel(z_ref, ss_ref, xs_ref, w3_ref, b3_ref, o_ref):
    # BN2 (folded scale/shift) + fused 1x1-conv shortcut + ReLU
    sc = jnp.dot(xs_ref[...], w3_ref[...],
                 preferred_element_type=jnp.float32) + b3_ref[...]
    o_ref[...] = jnp.maximum(
        z_ref[...].astype(jnp.float32) * ss_ref[0:1, :] + ss_ref[1:2, :] + sc, 0.0)


# ---------------- Pallas wrappers ----------------

def _conv3x3_stats(xp, w_taps, stride, ss_in=None, pad_output=False):
    """xp: (B, H+2, W+2, Cin_p) spatially padded, channel-padded, bf16 NHWC.
    If ss_in is given, the preceding BatchNorm affine + ReLU is applied to xp in-kernel.
    Returns bf16 z (optionally with a zero spatial border) and per-batch partial BN stats."""
    B, Hp, Wp, Cin_p = xp.shape
    Cout_p = w_taps.shape[-1]
    H, W = Hp - 2, Wp - 2
    Ho, Wo = (H - 1) // stride + 1, (W - 1) // stride + 1
    fuse = ss_in is not None
    assert not (fuse and stride != 1)

    if stride == 1:
        phase_ops = [xp]
    else:
        # spatial phase decomposition so every tap is a contiguous (un-strided) in-kernel slice
        phase_ops = [xp[:, ph::stride, pw::stride, :]
                     for ph in range(stride) for pw in range(stride)]

    operands = list(phase_ops)
    in_specs = [pl.BlockSpec((1,) + p.shape[1:], lambda b: (b, 0, 0, 0)) for p in phase_ops]
    if fuse:
        mask = jnp.pad(jnp.ones((H, W, 1), jnp.float32), ((1, 1), (1, 1), (0, 0)))
        operands += [ss_in, mask]
        in_specs += [pl.BlockSpec(ss_in.shape, lambda b: (0, 0)),
                     pl.BlockSpec(mask.shape, lambda b: (0, 0, 0))]
    operands.append(w_taps)
    in_specs.append(pl.BlockSpec(w_taps.shape, lambda b: (0, 0, 0)))

    z_shape = (B, Ho + 2, Wo + 2, Cout_p) if pad_output else (B, Ho, Wo, Cout_p)
    cost = pl.CostEstimate(
        flops=2 * B * Ho * Wo * 9 * Cin_p * Cout_p,
        transcendentals=0,
        bytes_accessed=2 * sum(p.size for p in phase_ops) + 2 * w_taps.size
                       + 2 * B * z_shape[1] * z_shape[2] * Cout_p + 4 * B * 8 * Cout_p)

    z, st = pl.pallas_call(
        _make_conv_kernel(stride, Ho, Wo, Cin_p, Cout_p, fuse, pad_output),
        out_shape=(jax.ShapeDtypeStruct(z_shape, jnp.bfloat16),
                   jax.ShapeDtypeStruct((B, 8, Cout_p), jnp.float32)),
        grid=(B,),
        in_specs=in_specs,
        out_specs=(pl.BlockSpec((1,) + z_shape[1:], lambda b: (b, 0, 0, 0)),
                   pl.BlockSpec((1, 8, Cout_p), lambda b: (b, 0, 0))),
        compiler_params=pltpu.CompilerParams(dimension_semantics=("parallel",)),
        cost_estimate=cost,
    )(*operands)
    return z, st, Ho, Wo


def _bn_scale_shift(stats, count, gamma_p, beta_p):
    s1 = jnp.sum(stats[:, 0, :], axis=0)
    s2 = jnp.sum(stats[:, 1, :], axis=0)
    mean = s1 / count
    var = jnp.maximum(s2 / count - mean * mean, 0.0)
    scale = gamma_p * jax.lax.rsqrt(var + EPS)
    shift = beta_p - mean * scale
    return jnp.stack([scale, shift], axis=0).astype(jnp.float32)   # (2, C)


def _bn_apply(z_flat, ss, sc_flat, w3=None, b3=None):
    """Row-tiled BN2 apply + shortcut add (identity or fused 1x1 conv) + ReLU."""
    M, Co = z_flat.shape
    TM = min(512, _ceil_to(M, 8))
    Mp = _ceil_to(M, TM)
    grid = (Mp // TM,)

    def pad_rows(a):
        return a if a.shape[0] == Mp else jnp.pad(a, ((0, Mp - a.shape[0]), (0, 0)))

    def rows(c):
        return pl.BlockSpec((TM, c), lambda i: (i, 0))

    def full(shape):
        return pl.BlockSpec(shape, lambda i, shape=shape: tuple(0 for _ in shape))

    cp = pltpu.CompilerParams(dimension_semantics=("parallel",))
    out_shape = jax.ShapeDtypeStruct((Mp, Co), jnp.float32)

    if w3 is None:
        out = pl.pallas_call(
            _bn_add_relu_kernel, out_shape=out_shape, grid=grid,
            in_specs=[rows(Co), full(ss.shape), rows(sc_flat.shape[1])],
            out_specs=rows(Co), compiler_params=cp)(
                pad_rows(z_flat), ss, pad_rows(sc_flat))
    else:
        out = pl.pallas_call(
            _bn_add_relu_1x1_kernel, out_shape=out_shape, grid=grid,
            in_specs=[rows(Co), full(ss.shape), rows(sc_flat.shape[1]),
                      full(w3.shape), full(b3.shape)],
            out_specs=rows(Co), compiler_params=cp)(
                pad_rows(z_flat), ss, pad_rows(sc_flat), w3, b3)
    return out[:M]


def residual_pallas(x_nchw, params, use_1x1conv, stride):
    x = jnp.transpose(x_nchw, (0, 2, 3, 1)).astype(jnp.float32)   # NHWC
    B, H, W, cin = x.shape
    cout = params["w1"].shape[-1]
    Cin_p, Cout_p = _ceil_to(cin, LANE), _ceil_to(cout, LANE)

    # channel-pad + bf16 storage of activations (f32 accumulation stays inside the kernels)
    x_cp = jnp.pad(x, ((0, 0), (0, 0), (0, 0), (0, Cin_p - cin))).astype(jnp.bfloat16)
    xp = jnp.pad(x_cp, ((0, 0), (1, 1), (1, 1), (0, 0)))

    w1 = _pad_last2(params["w1"], Cin_p, Cout_p).reshape(9, Cin_p, Cout_p).astype(jnp.bfloat16)
    w2 = _pad_last2(params["w2"], Cout_p, Cout_p).reshape(9, Cout_p, Cout_p).astype(jnp.bfloat16)
    g1, be1 = _pad_vec(params["g1"], Cout_p), _pad_vec(params["be1"], Cout_p)
    g2, be2 = _pad_vec(params["g2"], Cout_p), _pad_vec(params["be2"], Cout_p)

    # conv1 (3x3, pad 1, stride): bf16 z1 stored with zero spatial border + per-batch BN stats
    z1p, st1, H1, W1 = _conv3x3_stats(xp, w1, stride, ss_in=None, pad_output=True)
    M1 = B * H1 * W1
    ss1 = _bn_scale_shift(st1, M1, g1, be1)

    # conv2 (3x3, pad 1, stride 1) with BN1 + ReLU fused into its input path (no HBM round trip
    # of the BN1 output) + per-batch BN stats
    z2, st2, _, _ = _conv3x3_stats(z1p, w2, 1, ss_in=ss1, pad_output=False)
    ss2 = _bn_scale_shift(st2, M1, g2, be2)

    # BN2 + shortcut + ReLU (row-tiled, lane-dense, fused 1x1 shortcut matmul when requested)
    z2_flat = z2.reshape(M1, Cout_p)
    if use_1x1conv:
        w3 = _pad_last2(params["w3"].reshape(cin, cout), Cin_p, Cout_p).astype(jnp.bfloat16)
        b3 = _pad_vec(params["b3"], Cout_p).reshape(1, Cout_p)
        xs = x_cp[:, ::stride, ::stride, :].reshape(M1, Cin_p)      # tiny strided gather of x
        out_flat = _bn_apply(z2_flat, ss2, xs, w3, b3)
    else:
        assert stride == 1 and cin == cout, "identity shortcut needs stride=1, cin==cout"
        out_flat = _bn_apply(z2_flat, ss2, x_cp.reshape(M1, Cin_p))

    out = out_flat[:, :cout].reshape(B, H1, W1, cout)
    return jnp.transpose(out, (0, 3, 1, 2))          # back to NCHW


# ---------------- pure-JAX reference ----------------

def residual_ref(x_nchw, params, use_1x1conv, stride):
    x = jnp.transpose(x_nchw, (0, 2, 3, 1)).astype(jnp.float32)

    def conv(xx, w, b, s, pad):
        y = jax.lax.conv_general_dilated(
            xx, w, (s, s), [(pad, pad), (pad, pad)],
            dimension_numbers=("NHWC", "HWIO", "NHWC"))
        return y + b.reshape(1, 1, 1, -1)

    def bn(y, g, bt):
        m = jnp.mean(y, axis=(0, 1, 2), keepdims=True)
        v = jnp.mean((y - m) ** 2, axis=(0, 1, 2), keepdims=True)
        return g.reshape(1, 1, 1, -1) * (y - m) / jnp.sqrt(v + EPS) + bt.reshape(1, 1, 1, -1)

    y = jax.nn.relu(bn(conv(x, params["w1"], params["b1"], stride, 1),
                       params["g1"], params["be1"]))
    y = bn(conv(y, params["w2"], params["b2"], 1, 1), params["g2"], params["be2"])
    xs = conv(x, params["w3"], params["b3"], stride, 0) if use_1x1conv else x
    return jnp.transpose(jax.nn.relu(y + xs), (0, 3, 1, 2))


# ---------------- deterministic parameter init ----------------

def init_params(key, cin, cout, use_1x1conv):
    ks = jax.random.split(key, 10)

    def u(k, shape, scale=0.5, shift=0.0):
        return jax.random.uniform(k, shape, jnp.float32, -scale, scale) + shift

    p = dict(
        w1=u(ks[0], (3, 3, cin, cout)), b1=u(ks[1], (cout,)),
        w2=u(ks[2], (3, 3, cout, cout)), b2=u(ks[3], (cout,)),
        g1=u(ks[4], (cout,), 0.5, 1.0), be1=u(ks[5], (cout,)),
        g2=u(ks[6], (cout,), 0.5, 1.0), be2=u(ks[7], (cout,)),
    )
    if use_1x1conv:
        p["w3"] = u(ks[8], (1, 1, cin, cout))
        p["b3"] = u(ks[9], (cout,))
    return p


if __name__ == "__main__":
    key = jax.random.PRNGKey(0)
    kx, kp1, kp2 = jax.random.split(key, 3)

    # input matching the module's NCHW convention (small shapes)
    x = jax.random.uniform(kx, (2, 4, 16, 16), jnp.float32)

    # tolerance: bf16 storage / bf16 MXU operands (f32 accumulation) vs. an all-f32 reference
    TOL = 1e-1

    # Config A: downsampling block -- Residual(4, 8, use_1x1conv=True, stride=2)
    params_a = init_params(kp1, 4, 8, True)
    out_a = jax.block_until_ready(residual_pallas(x, params_a, True, 2))
    ref_a = residual_ref(x, params_a, True, 2)
    assert out_a.shape == (2, 8, 8, 8), out_a.shape
    assert float(jnp.max(jnp.abs(out_a - ref_a))) < TOL

    # Config B: identity shortcut -- Residual(4, 4) (use_1x1conv=False, stride=1)
    params_b = init_params(kp2, 4, 4, False)
    out_b = jax.block_until_ready(residual_pallas(x, params_b, False, 1))
    ref_b = residual_ref(x, params_b, False, 1)
    assert out_b.shape == (2, 4, 16, 16), out_b.shape
    assert float(jnp.max(jnp.abs(out_b - ref_b))) < TOL

    print("KERNEL_OK")
</pallas_src>

<mosaic_0001>
module attributes {stable_mosaic.version = 11 : i64} {
  func.func @kernel(%arg0: i32, %arg1: memref<1x9x9x128xbf16, #tpu.memory_space<vmem>>, %arg2: memref<1x9x9x128xbf16, #tpu.memory_space<vmem>>, %arg3: memref<1x9x9x128xbf16, #tpu.memory_space<vmem>>, %arg4: memref<1x9x9x128xbf16, #tpu.memory_space<vmem>>, %arg5: memref<9x128x128xbf16, #tpu.memory_space<vmem>>, %arg6: memref<1x10x10x128xbf16, #tpu.memory_space<vmem>>, %arg7: memref<1x8x128xf32, #tpu.memory_space<vmem>>) attributes {dimension_semantics = [#tpu.dimension_semantics<parallel>], iteration_bounds = array<i64: 2>, scalar_prefetch = 0 : i64, scratch_operands = 0 : i64, tpu.core_type = #tpu.core_type<tc>, window_params = [{transform_indices = @transform_0, window_bounds = array<i64: 1, 9, 9, 128>}, {transform_indices = @transform_1, window_bounds = array<i64: 1, 9, 9, 128>}, {transform_indices = @transform_2, window_bounds = array<i64: 1, 9, 9, 128>}, {transform_indices = @transform_3, window_bounds = array<i64: 1, 9, 9, 128>}, {pipeline_mode = #tpu.pipeline_mode<synchronous>, transform_indices = @transform_4, window_bounds = array<i64: 9, 128, 128>}, {transform_indices = @transform_5, window_bounds = array<i64: 1, 10, 10, 128>}, {transform_indices = @transform_6, window_bounds = array<i64: 1, 8, 128>}]} {
    %c0 = arith.constant 0 : index
    %c0_0 = arith.constant 0 : index
    %c0_1 = arith.constant 0 : index
    %c0_2 = arith.constant 0 : index
    %0 = vector.load %arg1[%c0, %c0_0, %c0_1, %c0_2] : memref<1x9x9x128xbf16, #tpu.memory_space<vmem>>, vector<1x9x9x128xbf16>
    %1 = vector.shape_cast %0 : vector<1x9x9x128xbf16> to vector<9x9x128xbf16>
    %c0_3 = arith.constant 0 : index
    %c0_4 = arith.constant 0 : index
    %c0_5 = arith.constant 0 : index
    %c0_6 = arith.constant 0 : index
    %2 = vector.load %arg2[%c0_3, %c0_4, %c0_5, %c0_6] : memref<1x9x9x128xbf16, #tpu.memory_space<vmem>>, vector<1x9x9x128xbf16>
    %3 = vector.shape_cast %2 : vector<1x9x9x128xbf16> to vector<9x9x128xbf16>
    %c0_7 = arith.constant 0 : index
    %c0_8 = arith.constant 0 : index
    %c0_9 = arith.constant 0 : index
    %c0_10 = arith.constant 0 : index
    %4 = vector.load %arg3[%c0_7, %c0_8, %c0_9, %c0_10] : memref<1x9x9x128xbf16, #tpu.memory_space<vmem>>, vector<1x9x9x128xbf16>
    %5 = vector.shape_cast %4 : vector<1x9x9x128xbf16> to vector<9x9x128xbf16>
    %c0_11 = arith.constant 0 : index
    %c0_12 = arith.constant 0 : index
    %c0_13 = arith.constant 0 : index
    %c0_14 = arith.constant 0 : index
    %6 = vector.load %arg4[%c0_11, %c0_12, %c0_13, %c0_14] : memref<1x9x9x128xbf16, #tpu.memory_space<vmem>>, vector<1x9x9x128xbf16>
    %7 = vector.shape_cast %6 : vector<1x9x9x128xbf16> to vector<9x9x128xbf16>
    %cst = arith.constant 0.000000e+00 : f32
    %8 = vector.broadcast %cst : f32 to vector<64x128xf32>
    %9 = vector.extract_strided_slice %1 {offsets = [0, 0, 0], sizes = [8, 8, 128], strides = [1, 1, 1]} : vector<9x9x128xbf16> to vector<8x8x128xbf16>
    %10 = vector.shape_cast %9 : vector<8x8x128xbf16> to vector<64x128xbf16>
    %c0_15 = arith.constant 0 : index
    %c0_16 = arith.constant 0 : index
    %c0_17 = arith.constant 0 : index
    %11 = vector.load %arg5[%c0_15, %c0_16, %c0_17] : memref<9x128x128xbf16, #tpu.memory_space<vmem>>, vector<1x128x128xbf16>
    %12 = vector.shape_cast %11 : vector<1x128x128xbf16> to vector<128x128xbf16>
    %cst_18 = arith.constant dense<0.000000e+00> : vector<64x128xf32>
    %13 = tpu.matmul %10, %12, %cst_18 {dimension_numbers = #tpu.dot_dimension_numbers<[1], [0], [0], [1], [0, 0, 1, 1], [], []>} : vector<64x128xbf16>, vector<128x128xbf16>, vector<64x128xf32> -> vector<64x128xf32>
    %14 = arith.addf %8, %13 : vector<64x128xf32>
    %15 = vector.extract_strided_slice %3 {offsets = [0, 0, 0], sizes = [8, 8, 128], strides = [1, 1, 1]} : vector<9x9x128xbf16> to vector<8x8x128xbf16>
    %16 = vector.shape_cast %15 : vector<8x8x128xbf16> to vector<64x128xbf16>
    %c1 = arith.constant 1 : index
    %c0_19 = arith.constant 0 : index
    %c0_20 = arith.constant 0 : index
    %17 = vector.load %arg5[%c1, %c0_19, %c0_20] : memref<9x128x128xbf16, #tpu.memory_space<vmem>>, vector<1x128x128xbf16>
    %18 = vector.shape_cast %17 : vector<1x128x128xbf16> to vector<128x128xbf16>
    %cst_21 = arith.constant dense<0.000000e+00> : vector<64x128xf32>
    %19 = tpu.matmul %16, %18, %cst_21 {dimension_numbers = #tpu.dot_dimension_numbers<[1], [0], [0], [1], [0, 0, 1, 1], [], []>} : vector<64x128xbf16>, vector<128x128xbf16>, vector<64x128xf32> -> vector<64x128xf32>
    %20 = arith.addf %14, %19 : vector<64x128xf32>
    %21 = vector.extract_strided_slice %1 {offsets = [0, 1, 0], sizes = [8, 8, 128], strides = [1, 1, 1]} : vector<9x9x128xbf16> to vector<8x8x128xbf16>
    %22 = vector.shape_cast %21 : vector<8x8x128xbf16> to vector<64x128xbf16>
    %c2 = arith.constant 2 : index
    %c0_22 = arith.constant 0 : index
    %c0_23 = arith.constant 0 : index
    %23 = vector.load %arg5[%c2, %c0_22, %c0_23] : memref<9x128x128xbf16, #tpu.memory_space<vmem>>, vector<1x128x128xbf16>
    %24 = vector.shape_cast %23 : vector<1x128x128xbf16> to vector<128x128xbf16>
    %cst_24 = arith.constant dense<0.000000e+00> : vector<64x128xf32>
    %25 = tpu.matmul %22, %24, %cst_24 {dimension_numbers = #tpu.dot_dimension_numbers<[1], [0], [0], [1], [0, 0, 1, 1], [], []>} : vector<64x128xbf16>, vector<128x128xbf16>, vector<64x128xf32> -> vector<64x128xf32>
    %26 = arith.addf %20, %25 : vector<64x128xf32>
    %27 = vector.extract_strided_slice %5 {offsets = [0, 0, 0], sizes = [8, 8, 128], strides = [1, 1, 1]} : vector<9x9x128xbf16> to vector<8x8x128xbf16>
    %28 = vector.shape_cast %27 : vector<8x8x128xbf16> to vector<64x128xbf16>
    %c3 = arith.constant 3 : index
    %c0_25 = arith.constant 0 : index
    %c0_26 = arith.constant 0 : index
    %29 = vector.load %arg5[%c3, %c0_25, %c0_26] : memref<9x128x128xbf16, #tpu.memory_space<vmem>>, vector<1x128x128xbf16>
    %30 = vector.shape_cast %29 : vector<1x128x128xbf16> to vector<128x128xbf16>
    %cst_27 = arith.constant dense<0.000000e+00> : vector<64x128xf32>
    %31 = tpu.matmul %28, %30, %cst_27 {dimension_numbers = #tpu.dot_dimension_numbers<[1], [0], [0], [1], [0, 0, 1, 1], [], []>} : vector<64x128xbf16>, vector<128x128xbf16>, vector<64x128xf32> -> vector<64x128xf32>
    %32 = arith.addf %26, %31 : vector<64x128xf32>
    %33 = vector.extract_strided_slice %7 {offsets = [0, 0, 0], sizes = [8, 8, 128], strides = [1, 1, 1]} : vector<9x9x128xbf16> to vector<8x8x128xbf16>
    %34 = vector.shape_cast %33 : vector<8x8x128xbf16> to vector<64x128xbf16>
    %c4 = arith.constant 4 : index
    %c0_28 = arith.constant 0 : index
    %c0_29 = arith.constant 0 : index
    %35 = vector.load %arg5[%c4, %c0_28, %c0_29] : memref<9x128x128xbf16, #tpu.memory_space<vmem>>, vector<1x128x128xbf16>
    %36 = vector.shape_cast %35 : vector<1x128x128xbf16> to vector<128x128xbf16>
    %cst_30 = arith.constant dense<0.000000e+00> : vector<64x128xf32>
    %37 = tpu.matmul %34, %36, %cst_30 {dimension_numbers = #tpu.dot_dimension_numbers<[1], [0], [0], [1], [0, 0, 1, 1], [], []>} : vector<64x128xbf16>, vector<128x128xbf16>, vector<64x128xf32> -> vector<64x128xf32>
    %38 = arith.addf %32, %37 : vector<64x128xf32>
    %39 = vector.extract_strided_slice %5 {offsets = [0, 1, 0], sizes = [8, 8, 128], strides = [1, 1, 1]} : vector<9x9x128xbf16> to vector<8x8x128xbf16>
    %40 = vector.shape_cast %39 : vector<8x8x128xbf16> to vector<64x128xbf16>
    %c5 = arith.constant 5 : index
    %c0_31 = arith.constant 0 : index
    %c0_32 = arith.constant 0 : index
    %41 = vector.load %arg5[%c5, %c0_31, %c0_32] : memref<9x128x128xbf16, #tpu.memory_space<vmem>>, vector<1x128x128xbf16>
    %42 = vector.shape_cast %41 : vector<1x128x128xbf16> to vector<128x128xbf16>
    %cst_33 = arith.constant dense<0.000000e+00> : vector<64x128xf32>
    %43 = tpu.matmul %40, %42, %cst_33 {dimension_numbers = #tpu.dot_dimension_numbers<[1], [0], [0], [1], [0, 0, 1, 1], [], []>} : vector<64x128xbf16>, vector<128x128xbf16>, vector<64x128xf32> -> vector<64x128xf32>
    %44 = arith.addf %38, %43 : vector<64x128xf32>
    %45 = vector.extract_strided_slice %1 {offsets = [1, 0, 0], sizes = [8, 8, 128], strides = [1, 1, 1]} : vector<9x9x128xbf16> to vector<8x8x128xbf16>
    %46 = vector.shape_cast %45 : vector<8x8x128xbf16> to vector<64x128xbf16>
    %c6 = arith.constant 6 : index
    %c0_34 = arith.constant 0 : index
    %c0_35 = arith.constant 0 : index
    %47 = vector.load %arg5[%c6, %c0_34, %c0_35] : memref<9x128x128xbf16, #tpu.memory_space<vmem>>, vector<1x128x128xbf16>
    %48 = vector.shape_cast %47 : vector<1x128x128xbf16> to vector<128x128xbf16>
    %cst_36 = arith.constant dense<0.000000e+00> : vector<64x128xf32>
    %49 = tpu.matmul %46, %48, %cst_36 {dimension_numbers = #tpu.dot_dimension_numbers<[1], [0], [0], [1], [0, 0, 1, 1], [], []>} : vector<64x128xbf16>, vector<128x128xbf16>, vector<64x128xf32> -> vector<64x128xf32>
    %50 = arith.addf %44, %49 : vector<64x128xf32>
    %51 = vector.extract_strided_slice %3 {offsets = [1, 0, 0], sizes = [8, 8, 128], strides = [1, 1, 1]} : vector<9x9x128xbf16> to vector<8x8x128xbf16>
    %52 = vector.shape_cast %51 : vector<8x8x128xbf16> to vector<64x128xbf16>
    %c7 = arith.constant 7 : index
    %c0_37 = arith.constant 0 : index
    %c0_38 = arith.constant 0 : index
    %53 = vector.load %arg5[%c7, %c0_37, %c0_38] : memref<9x128x128xbf16, #tpu.memory_space<vmem>>, vector<1x128x128xbf16>
    %54 = vector.shape_cast %53 : vector<1x128x128xbf16> to vector<128x128xbf16>
    %cst_39 = arith.constant dense<0.000000e+00> : vector<64x128xf32>
    %55 = tpu.matmul %52, %54, %cst_39 {dimension_numbers = #tpu.dot_dimension_numbers<[1], [0], [0], [1], [0, 0, 1, 1], [], []>} : vector<64x128xbf16>, vector<128x128xbf16>, vector<64x128xf32> -> vector<64x128xf32>
    %56 = arith.addf %50, %55 : vector<64x128xf32>
    %57 = vector.extract_strided_slice %1 {offsets = [1, 1, 0], sizes = [8, 8, 128], strides = [1, 1, 1]} : vector<9x9x128xbf16> to vector<8x8x128xbf16>
    %58 = vector.shape_cast %57 : vector<8x8x128xbf16> to vector<64x128xbf16>
    %c8 = arith.constant 8 : index
    %c0_40 = arith.constant 0 : index
    %c0_41 = arith.constant 0 : index
    %59 = vector.load %arg5[%c8, %c0_40, %c0_41] : memref<9x128x128xbf16, #tpu.memory_space<vmem>>, vector<1x128x128xbf16>
    %60 = vector.shape_cast %59 : vector<1x128x128xbf16> to vector<128x128xbf16>
    %cst_42 = arith.constant dense<0.000000e+00> : vector<64x128xf32>
    %61 = tpu.matmul %58, %60, %cst_42 {dimension_numbers = #tpu.dot_dimension_numbers<[1], [0], [0], [1], [0, 0, 1, 1], [], []>} : vector<64x128xbf16>, vector<128x128xbf16>, vector<64x128xf32> -> vector<64x128xf32>
    %62 = arith.addf %56, %61 : vector<64x128xf32>
    %cst_43 = arith.constant 0.000000e+00 : f32
    %63 = vector.broadcast %cst_43 : f32 to vector<8x128xf32>
    %c0_44 = arith.constant 0 : index
    %c0_45 = arith.constant 0 : index
    %c0_46 = arith.constant 0 : index
    %64 = vector.load %arg7[%c0_44, %c0_45, %c0_46] : memref<1x8x128xf32, #tpu.memory_space<vmem>>, vector<1x8x128xf32>
    %65 = vector.shape_cast %64 : vector<1x8x128xf32> to vector<8x128xf32>
    %66 = vector.shape_cast %63 : vector<8x128xf32> to vector<1x8x128xf32>
    tpu.vector_store %arg7[%c0_44, %c0_45, %c0_46], %66 {strides = array<i32>} : memref<1x8x128xf32, #tpu.memory_space<vmem>>, vector<1x8x128xf32>,
    %cst_47 = arith.constant dense<0.000000e+00> : vector<128xf32>
    %67 = vector.multi_reduction <add>, %62, %cst_47 [0] : vector<64x128xf32> to vector<128xf32>
    %68 = vector.shape_cast %67 : vector<128xf32> to vector<1x128xf32>
    %c0_48 = arith.constant 0 : index
    %c0_49 = arith.constant 0 : index
    %c0_50 = arith.constant 0 : index
    %69 = vector.load %arg7[%c0_48, %c0_49, %c0_50] : memref<1x8x128xf32, #tpu.memory_space<vmem>>, vector<1x1x128xf32>
    %70 = vector.shape_cast %69 : vector<1x1x128xf32> to vector<1x128xf32>
    %71 = vector.shape_cast %68 : vector<1x128xf32> to vector<1x1x128xf32>
    tpu.vector_store %arg7[%c0_48, %c0_49, %c0_50], %71 {strides = array<i32>} : memref<1x8x128xf32, #tpu.memory_space<vmem>>, vector<1x1x128xf32>,
    %72 = arith.mulf %62, %62 : vector<64x128xf32>
    %cst_51 = arith.constant dense<0.000000e+00> : vector<128xf32>
    %73 = vector.multi_reduction <add>, %72, %cst_51 [0] : vector<64x128xf32> to vector<128xf32>
    %74 = vector.shape_cast %73 : vector<128xf32> to vector<1x128xf32>
    %c0_52 = arith.constant 0 : index
    %c1_53 = arith.constant 1 : index
    %c0_54 = arith.constant 0 : index
    %75 = vector.load %arg7[%c0_52, %c1_53, %c0_54] : memref<1x8x128xf32, #tpu.memory_space<vmem>>, vector<1x1x128xf32>
    %76 = vector.shape_cast %75 : vector<1x1x128xf32> to vector<1x128xf32>
    %77 = vector.shape_cast %74 : vector<1x128xf32> to vector<1x1x128xf32>
    tpu.vector_store %arg7[%c0_52, %c1_53, %c0_54], %77 {strides = array<i32>} : memref<1x8x128xf32, #tpu.memory_space<vmem>>, vector<1x1x128xf32>,
    %78 = vector.shape_cast %62 : vector<64x128xf32> to vector<8x8x128xf32>
    %79 = arith.truncf %78 : vector<8x8x128xf32> to vector<8x8x128xbf16>
    %cst_55 = arith.constant 0.000000e+00 : bf16
    %80 = vector.broadcast %cst_55 : bf16 to vector<1x10x10x128xbf16>
    %c0_56 = arith.constant 0 : index
    %c0_57 = arith.constant 0 : index
    %c0_58 = arith.constant 0 : index
    %c0_59 = arith.constant 0 : index
    %81 = vector.load %arg6[%c0_56, %c0_57, %c0_58, %c0_59] : memref<1x10x10x128xbf16, #tpu.memory_space<vmem>>, vector<1x10x10x128xbf16>
    tpu.vector_store %arg6[%c0_56, %c0_57, %c0_58, %c0_59], %80 {strides = array<i32>} : memref<1x10x10x128xbf16, #tpu.memory_space<vmem>>, vector<1x10x10x128xbf16>,
    %c0_60 = arith.constant 0 : index
    %c1_61 = arith.constant 1 : index
    %c1_62 = arith.constant 1 : index
    %c0_63 = arith.constant 0 : index
    %82 = vector.load %arg6[%c0_60, %c1_61, %c1_62, %c0_63] : memref<1x10x10x128xbf16, #tpu.memory_space<vmem>>, vector<1x8x8x128xbf16>
    %83 = vector.shape_cast %82 : vector<1x8x8x128xbf16> to vector<8x8x128xbf16>
    %84 = vector.shape_cast %79 : vector<8x8x128xbf16> to vector<1x8x8x128xbf16>
    tpu.vector_store %arg6[%c0_60, %c1_61, %c1_62, %c0_63], %84 {strides = array<i32>} : memref<1x10x10x128xbf16, #tpu.memory_space<vmem>>, vector<1x8x8x128xbf16>,
    return
  }
  func.func @transform_0(%arg0: i32) -> (i32, i32, i32, i32) {
    %c0_i32 = arith.constant 0 : i32
    %c0_i32_0 = arith.constant 0 : i32
    %c0_i32_1 = arith.constant 0 : i32
    %c0_i32_2 = arith.constant 0 : i32
    return %arg0, %c0_i32, %c0_i32_0, %c0_i32_1 : i32, i32, i32, i32
  }
  func.func @transform_1(%arg0: i32) -> (i32, i32, i32, i32) {
    %c0_i32 = arith.constant 0 : i32
    %c0_i32_0 = arith.constant 0 : i32
    %c0_i32_1 = arith.constant 0 : i32
    %c0_i32_2 = arith.constant 0 : i32
    return %arg0, %c0_i32, %c0_i32_0, %c0_i32_1 : i32, i32, i32, i32
  }
  func.func @transform_2(%arg0: i32) -> (i32, i32, i32, i32) {
    %c0_i32 = arith.constant 0 : i32
    %c0_i32_0 = arith.constant 0 : i32
    %c0_i32_1 = arith.constant 0 : i32
    %c0_i32_2 = arith.constant 0 : i32
    return %arg0, %c0_i32, %c0_i32_0, %c0_i32_1 : i32, i32, i32, i32
  }
  func.func @transform_3(%arg0: i32) -> (i32, i32, i32, i32) {
    %c0_i32 = arith.constant 0 : i32
    %c0_i32_0 = arith.constant 0 : i32
    %c0_i32_1 = arith.constant 0 : i32
    %c0_i32_2 = arith.constant 0 : i32
    return %arg0, %c0_i32, %c0_i32_0, %c0_i32_1 : i32, i32, i32, i32
  }
  func.func @transform_4(%arg0: i32) -> (i32, i32, i32) {
    %c0_i32 = arith.constant 0 : i32
    %c0_i32_0 = arith.constant 0 : i32
    %c0_i32_1 = arith.constant 0 : i32
    %c0_i32_2 = arith.constant 0 : i32
    return %c0_i32, %c0_i32_0, %c0_i32_1 : i32, i32, i32
  }
  func.func @transform_5(%arg0: i32) -> (i32, i32, i32, i32) {
    %c0_i32 = arith.constant 0 : i32
    %c0_i32_0 = arith.constant 0 : i32
    %c0_i32_1 = arith.constant 0 : i32
    %c0_i32_2 = arith.constant 0 : i32
    return %arg0, %c0_i32, %c0_i32_0, %c0_i32_1 : i32, i32, i32, i32
  }
  func.func @transform_6(%arg0: i32) -> (i32, i32, i32) {
    %c0_i32 = arith.constant 0 : i32
    %c0_i32_0 = arith.constant 0 : i32
    %c0_i32_1 = arith.constant 0 : i32
    return %arg0, %c0_i32, %c0_i32_0 : i32, i32, i32
  }
}

</mosaic_0001>

<llo_original>
// kernel: tpu_custom_call.1
$region0: #{tpu_custom_call.1}
  #allocation0 [shape = 'u32[]', space=smem, size = 0x4, offset = 0x4, fixed_abs, tag = 'smem constant byte address 0x4 - core index']
  #allocation1 [shape = 'u32[144,128]{1,0:T(1,128)}', space=vmem, size = 0x12000, scoped, tag = 'internal scratch']
  %s0 = inlined_call_operand.vmem [shape: bf16[2,9,9,128], index: 0, kind: input, shape index: {}]
  %s1 = inlined_call_operand.vmem [shape: bf16[2,9,9,128], index: 1, kind: input, shape index: {}]
  %s2 = inlined_call_operand.vmem [shape: bf16[2,9,9,128], index: 2, kind: input, shape index: {}]
  %s3 = inlined_call_operand.vmem [shape: bf16[2,9,9,128], index: 3, kind: input, shape index: {}]
  %s4 = inlined_call_operand.vmem [shape: bf16[9,128,128], index: 4, kind: input, shape index: {}]
  %s5 = inlined_call_operand.vmem [shape: bf16[2,10,10,128], index: 5, kind: output, shape index: {0}]
  %s6 = inlined_call_operand.hbm [shape: f32[2,8,128], index: 6, kind: output, shape index: {1}]
  %7 = xla_tuple %s5, %s6
  %s8 = sld [smem:[#allocation0]]
  $region61: #{tpu_custom_call.1} parent=0
    _
  %s10 = ssub.s32 1, %s8
  %s11 = scalar_select 0, %s10, %s8
  $region1: #{tpu_custom_call.1} parent=0
    #allocation2 [shape = 'u8[8192]{0}', space=vmem, size = 0x2000, scoped, tag = 'output window, operand 1']
    #allocation3 [shape = 's32[2]{0}', space=sflag, size = 0x8, scoped, tag = 'scoped memory for tpu_custom_call.1']
    %12 = vsyncpa [#allocation3], 0
    %s13 = scalar_lea.sflag [#allocation3], 1
    %14 = vsyncpa %s13, 0
    loop: start=0, step=1, limit=4
    $region2: #{tpu_custom_call.1} parent=1 // loop_pre_header
      _
    $region3: #{tpu_custom_call.1} parent=1 // loop_header
      %s16 = sphi 0, %s20
      %p17 = scmp.ge.s32.totalorder %s16, 4
      %s26 = sphi 0, %s28
      %s29 = sphi 0, %s26
      %s30 = sphi 0, %s29
      %s46 = sphi 0, %s30
      %s52 = sphi 0, %s54
      %s55 = sphi 0, %s52
      %s56 = sphi 0, %s55
      %s72 = sphi 0, %s56
      %s78 = sphi 0, %s80
      %s81 = sphi 0, %s78
      %s82 = sphi 0, %s81
      %s98 = sphi 0, %s82
      %s104 = sphi 0, %s106
      %s107 = sphi 0, %s104
      %s108 = sphi 0, %s107
      %s124 = sphi 0, %s108
      %s128 = sphi 0, %s128
      %s130 = sphi 0, %s128
      %s131 = sphi 0, %s130
      %s145 = sphi 0, %s131
      %s151 = sphi 0, %s153
      %s154 = sphi 0, %s151
      %s155 = sphi 0, %s154
      %s171 = sphi 0, %s155
      %s177 = sphi 0, %s179
      %s180 = sphi 0, %s177
      %s181 = sphi 0, %s180
      %s197 = sphi 0, %s181
    $region4: #{tpu_custom_call.1} parent=1 // loop_header_branch
      %19 = sbr.rel (%p17) target = $region8
    $region5: #{tpu_custom_call.1} parent=1 // loop_body
      %s21 = ssub.s32 %s16, 1
      %s22 = ssub.s32 %s16, 2
      %s23 = sadd.s32 %s16, 1
      %s24 = ssub.s32 %s16, %s23
      %p25 = scmp.eq.s32.totalorder %s24, 0
      %s27 = sadd.s32 %s26, 1
      %s28 = scalar_select %p25, %s26, %s27
      %p31 = pneg %p25
      %p32 = scmp.eq.s32.totalorder %s16, 1
      %p33 = por %p31, %p32
      %p34 = scmp.ne.s32.totalorder %s26, %s29
      %p35 = scmp.eq.s32.totalorder %s16, 0
      %p36 = por %p34, %p35
      %p37 = scmp.ne.s32.totalorder %s26, %s29
      %p38 = scmp.eq.s32.totalorder %s21, 1
      %p39 = por %p37, %p38
      %p40 = scmp.ne.s32.totalorder %s29, %s30
      %p41 = scmp.eq.s32.totalorder %s21, 0
      %p42 = por %p40, %p41
      %p43 = scmp.ne.s32.totalorder %s29, %s30
      %p44 = scmp.eq.s32.totalorder %s22, 1
      %p45 = por %p43, %p44
      %p47 = scmp.ne.s32.totalorder %s30, %s46
      %p48 = scmp.eq.s32.totalorder %s22, 0
      %p49 = por %p47, %p48
      %s50 = ssub.s32 %s16, %s23
      %p51 = scmp.eq.s32.totalorder %s50, 0
      %s53 = sadd.s32 %s52, 1
      %s54 = scalar_select %p51, %s52, %s53
      %p57 = pneg %p51
      %p58 = scmp.eq.s32.totalorder %s16, 1
      %p59 = por %p57, %p58
      %p60 = scmp.ne.s32.totalorder %s52, %s55
      %p61 = scmp.eq.s32.totalorder %s16, 0
      %p62 = por %p60, %p61
      %p63 = scmp.ne.s32.totalorder %s52, %s55
      %p64 = scmp.eq.s32.totalorder %s21, 1
      %p65 = por %p63, %p64
      %p66 = scmp.ne.s32.totalorder %s55, %s56
      %p67 = scmp.eq.s32.totalorder %s21, 0
      %p68 = por %p66, %p67
      %p69 = scmp.ne.s32.totalorder %s55, %s56
      %p70 = scmp.eq.s32.totalorder %s22, 1
      %p71 = por %p69, %p70
      %p73 = scmp.ne.s32.totalorder %s56, %s72
      %p74 = scmp.eq.s32.totalorder %s22, 0
      %p75 = por %p73, %p74
      %s76 = ssub.s32 %s16, %s23
      %p77 = scmp.eq.s32.totalorder %s76, 0
      %s79 = sadd.s32 %s78, 1
      %s80 = scalar_select %p77, %s78, %s79
      %p83 = pneg %p77
      %p84 = scmp.eq.s32.totalorder %s16, 1
      %p85 = por %p83, %p84
      %p86 = scmp.ne.s32.totalorder %s78, %s81
      %p87 = scmp.eq.s32.totalorder %s16, 0
      %p88 = por %p86, %p87
      %p89 = scmp.ne.s32.totalorder %s78, %s81
      %p90 = scmp.eq.s32.totalorder %s21, 1
      %p91 = por %p89, %p90
      %p92 = scmp.ne.s32.totalorder %s81, %s82
      %p93 = scmp.eq.s32.totalorder %s21, 0
      %p94 = por %p92, %p93
      %p95 = scmp.ne.s32.totalorder %s81, %s82
      %p96 = scmp.eq.s32.totalorder %s22, 1
      %p97 = por %p95, %p96
      %p99 = scmp.ne.s32.totalorder %s82, %s98
      %p100 = scmp.eq.s32.totalorder %s22, 0
      %p101 = por %p99, %p100
      %s102 = ssub.s32 %s16, %s23
      %p103 = scmp.eq.s32.totalorder %s102, 0
      %s105 = sadd.s32 %s104, 1
      %s106 = scalar_select %p103, %s104, %s105
      %p109 = pneg %p103
      %p110 = scmp.eq.s32.totalorder %s16, 1
      %p111 = por %p109, %p110
      %p112 = scmp.ne.s32.totalorder %s104, %s107
      %p113 = scmp.eq.s32.totalorder %s16, 0
      %p114 = por %p112, %p113
      %p115 = scmp.ne.s32.totalorder %s104, %s107
      %p116 = scmp.eq.s32.totalorder %s21, 1
      %p117 = por %p115, %p116
      %p118 = scmp.ne.s32.totalorder %s107, %s108
      %p119 = scmp.eq.s32.totalorder %s21, 0
      %p120 = por %p118, %p119
      %p121 = scmp.ne.s32.totalorder %s107, %s108
      %p122 = scmp.eq.s32.totalorder %s22, 1
      %p123 = por %p121, %p122
      %p125 = scmp.ne.s32.totalorder %s108, %s124
      %p126 = scmp.eq.s32.totalorder %s22, 0
      %p127 = por %p125, %p126
      %s129 = sadd.s32 %s128, 1
      %p132 = scmp.eq.s32.totalorder %s16, 1
      %p133 = scmp.ne.s32.totalorder %s128, %s130
      %p134 = scmp.eq.s32.totalorder %s16, 0
      %p135 = por %p133, %p134
      %p136 = scmp.ne.s32.totalorder %s128, %s130
      %p137 = scmp.eq.s32.totalorder %s21, 1
      %p138 = por %p136, %p137
      %p139 = scmp.ne.s32.totalorder %s130, %s131
      %p140 = scmp.eq.s32.totalorder %s21, 0
      %p141 = por %p139, %p140
      %p142 = scmp.ne.s32.totalorder %s130, %s131
      %p143 = scmp.eq.s32.totalorder %s22, 1
      %p144 = por %p142, %p143
      %p146 = scmp.ne.s32.totalorder %s131, %s145
      %p147 = scmp.eq.s32.totalorder %s22, 0
      %p148 = por %p146, %p147
      %s149 = ssub.s32 %s16, %s23
      %p150 = scmp.eq.s32.totalorder %s149, 0
      %s152 = sadd.s32 %s151, 1
      %s153 = scalar_select %p150, %s151, %s152
      %p156 = pneg %p150
      %p157 = scmp.eq.s32.totalorder %s16, 1
      %p158 = por %p156, %p157
      %p159 = scmp.ne.s32.totalorder %s151, %s154
      %p160 = scmp.eq.s32.totalorder %s16, 0
      %p161 = por %p159, %p160
      %p162 = scmp.ne.s32.totalorder %s151, %s154
      %p163 = scmp.eq.s32.totalorder %s21, 1
      %p164 = por %p162, %p163
      %p165 = scmp.ne.s32.totalorder %s154, %s155
      %p166 = scmp.eq.s32.totalorder %s21, 0
      %p167 = por %p165, %p166
      %p168 = scmp.ne.s32.totalorder %s154, %s155
      %p169 = scmp.eq.s32.totalorder %s22, 1
      %p170 = por %p168, %p169
      %p172 = scmp.ne.s32.totalorder %s155, %s171
      %p173 = scmp.eq.s32.totalorder %s22, 0
      %p174 = por %p172, %p173
      %s175 = ssub.s32 %s16, %s23
      %p176 = scmp.eq.s32.totalorder %s175, 0
      %s178 = sadd.s32 %s177, 1
      %s179 = scalar_select %p176, %s177, %s178
      %p182 = pneg %p176
      %p183 = scmp.eq.s32.totalorder %s16, 1
      %p184 = por %p182, %p183
      %p185 = scmp.ne.s32.totalorder %s177, %s180
      %p186 = scmp.eq.s32.totalorder %s16, 0
      %p187 = por %p185, %p186
      %p188 = scmp.ne.s32.totalorder %s177, %s180
      %p189 = scmp.eq.s32.totalorder %s21, 1
      %p190 = por %p188, %p189
      %p191 = scmp.ne.s32.totalorder %s180, %s181
      %p192 = scmp.eq.s32.totalorder %s21, 0
      %p193 = por %p191, %p192
      %p194 = scmp.ne.s32.totalorder %s180, %s181
      %p195 = scmp.eq.s32.totalorder %s22, 1
      %p196 = por %p194, %p195
      %p198 = scmp.ne.s32.totalorder %s181, %s197
      %p199 = scmp.eq.s32.totalorder %s22, 0
      %p200 = por %p198, %p199
      %p201 = scmp.le.s32.totalorder 1, %s16
      %p202 = scmp.lt.s32.totalorder %s16, 3
      %p203 = pnand %p201, %p202
      %p204 = pneg %p203
      // Predicated region
      $region9: #{tpu_custom_call.1} parent=5 // pred_check
        _
      $region10: #{tpu_custom_call.1} parent=5 // pred_check_branch
        %206 = sbr.rel (%p203) target = $region12
      $region11: #{tpu_custom_call.1} parent=5 // pred_region
        %s207 = ssub.s32 %s16, 1
        // Predicated region
        $region13: #{tpu_custom_call.1} parent=11 // pred_check
          %p208 = pneg %p141
        $region14: #{tpu_custom_call.1} parent=11 // pred_check_branch
          %210 = sbr.rel (%p208) target = $region16
        $region15: #{tpu_custom_call.1} parent=11 // pred_region
          _
        $region16: #{tpu_custom_call.1} parent=11 // pred_fallthru
          _
      $region12: #{tpu_custom_call.1} parent=5 // pred_fallthru
        _
      %p211 = scmp.lt.s32.totalorder %s16, 2
      // Predicated region
      $region17: #{tpu_custom_call.1} parent=5 // pred_check
        %p212 = pneg %p211
      $region18: #{tpu_custom_call.1} parent=5 // pred_check_branch
        %214 = sbr.rel (%p212) target = $region20
      $region19: #{tpu_custom_call.1} parent=5 // pred_region
        // Predicated region
        $region21: #{tpu_custom_call.1} parent=19 // pred_check
          %p215 = pneg %p36
        $region22: #{tpu_custom_call.1} parent=19 // pred_check_branch
          %217 = sbr.rel (%p215) target = $region24
        $region23: #{tpu_custom_call.1} parent=19 // pred_region
          %p218 = scmp.lt.s32.totalorder %s16, 1
          %s219 = scalar_select %p218, %s16, 1
          %s220 = smul.addr %s219, 18
          %s221 = smul.addr %s220, 4
          %s222 = scalar_lea.vmem %s0, %s221
        $region24: #{tpu_custom_call.1} parent=19 // pred_fallthru
          _
        // Predicated region
        $region25: #{tpu_custom_call.1} parent=19 // pred_check
          %p223 = pneg %p62
        $region26: #{tpu_custom_call.1} parent=19 // pred_check_branch
          %225 = sbr.rel (%p223) target = $region28
        $region27: #{tpu_custom_call.1} parent=19 // pred_region
          %p226 = scmp.lt.s32.totalorder %s16, 1
          %s227 = scalar_select %p226, %s16, 1
          %s228 = smul.addr %s227, 18
          %s229 = smul.addr %s228, 4
          %s230 = scalar_lea.vmem %s1, %s229
        $region28: #{tpu_custom_call.1} parent=19 // pred_fallthru
          _
        // Predicated region
        $region29: #{tpu_custom_call.1} parent=19 // pred_check
          %p231 = pneg %p88
        $region30: #{tpu_custom_call.1} parent=19 // pred_check_branch
          %233 = sbr.rel (%p231) target = $region32
        $region31: #{tpu_custom_call.1} parent=19 // pred_region
          %p234 = scmp.lt.s32.totalorder %s16, 1
          %s235 = scalar_select %p234, %s16, 1
          %s236 = smul.addr %s235, 18
          %s237 = smul.addr %s236, 4
          %s238 = scalar_lea.vmem %s2, %s237
        $region32: #{tpu_custom_call.1} parent=19 // pred_fallthru
          _
        // Predicated region
        $region33: #{tpu_custom_call.1} parent=19 // pred_check
          %p239 = pneg %p114
        $region34: #{tpu_custom_call.1} parent=19 // pred_check_branch
          %241 = sbr.rel (%p239) target = $region36
        $region35: #{tpu_custom_call.1} parent=19 // pred_region
          %p242 = scmp.lt.s32.totalorder %s16, 1
          %s243 = scalar_select %p242, %s16, 1
          %s244 = smul.addr %s243, 18
          %s245 = smul.addr %s244, 4
          %s246 = scalar_lea.vmem %s3, %s245
        $region36: #{tpu_custom_call.1} parent=19 // pred_fallthru
          _
      $region20: #{tpu_custom_call.1} parent=5 // pred_fallthru
        _
      %p247 = scmp.le.s32.totalorder 1, %s16
      %p248 = scmp.lt.s32.totalorder %s16, 3
      %p249 = pnand %p247, %p248
      %p250 = pneg %p249
      // Predicated region
      $region37: #{tpu_custom_call.1} parent=5 // pred_check
        _
      $region38: #{tpu_custom_call.1} parent=5 // pred_check_branch
        %252 = sbr.rel (%p249) target = $region40
      $region39: #{tpu_custom_call.1} parent=5 // pred_region
        %s253 = ssub.s32 %s16, 1
        %p254 = scmp.lt.s32.totalorder %s21, 1
        %s255 = scalar_select %p254, %s21, 1
        %s256 = smul.addr %s255, 18
        %s257 = smul.addr %s256, 4
        %s258 = scalar_lea.vmem %s0, %s257
        %p259 = pneg %p42
        %p260 = pneg %p39
        %p261 = scmp.lt.s32.totalorder %s21, 1
        %s262 = scalar_select %p261, %s21, 1
        %s263 = smul.addr %s262, 18
        %s264 = smul.addr %s263, 4
        %s265 = scalar_lea.vmem %s1, %s264
        %p266 = pneg %p68
        %p267 = pneg %p65
        %p268 = scmp.lt.s32.totalorder %s21, 1
        %s269 = scalar_select %p268, %s21, 1
        %s270 = smul.addr %s269, 18
        %s271 = smul.addr %s270, 4
        %s272 = scalar_lea.vmem %s2, %s271
        %p273 = pneg %p94
        %p274 = pneg %p91
        %p275 = scmp.lt.s32.totalorder %s21, 1
        %s276 = scalar_select %p275, %s21, 1
        %s277 = smul.addr %s276, 18
        %s278 = smul.addr %s277, 4
        %s279 = scalar_lea.vmem %s3, %s278
        %p280 = pneg %p120
        %p281 = pneg %p117
        %p282 = pneg %p141
        %p283 = pneg %p138
        %p284 = pneg %p167
        %p285 = pneg %p164
        %p286 = scmp.lt.s32.totalorder %s21, 1
        %s287 = scalar_select %p286, %s21, 1
        %s288 = smul.addr %s287, 20
        %s289 = smul.addr %s288, 4
        %s290 = scalar_lea.vmem %s5, %s289
        %p291 = pneg %p193
        %p292 = pneg %p190
        %s293 = sand.u32 %s180, 1
        %s294 = scalar_lea.sflag [#allocation3], %s293
        %s295 = sand.u32 %s180, 1
        %s296 = smul.addr %s295, 8
        %s297 = scalar_lea.vmem [#allocation2], %s296
        %p298 = scmp.lt.s32.totalorder %s21, 1
        %s299 = scalar_select %p298, %s21, 1
        %s300 = smul.addr %s299, 18
        %s301 = smul.addr %s300, 4
        %s302 = scalar_lea.vmem %s0, %s301
        %p303 = scmp.lt.s32.totalorder %s21, 1
        %s304 = scalar_select %p303, %s21, 1
        %s305 = smul.addr %s304, 18
        %s306 = smul.addr %s305, 4
        %s307 = scalar_lea.vmem %s1, %s306
        %p308 = scmp.lt.s32.totalorder %s21, 1
        %s309 = scalar_select %p308, %s21, 1
        %s310 = smul.addr %s309, 18
        %s311 = smul.addr %s310, 4
        %s312 = scalar_lea.vmem %s2, %s311
        %p313 = scmp.lt.s32.totalorder %s21, 1
        %s314 = scalar_select %p313, %s21, 1
        %s315 = smul.addr %s314, 18
        %s316 = smul.addr %s315, 4
        %s317 = scalar_lea.vmem %s3, %s316
        %p318 = scmp.lt.s32.totalorder %s21, 1
        %s319 = scalar_select %p318, %s21, 1
        %s320 = smul.addr %s319, 20
        %s321 = smul.addr %s320, 4
        %s322 = scalar_lea.vmem %s5, %s321
        %v324 = vld [vmem:[%s302] sm:$0xf]
        %v325 = vld [vmem:[%s302 + $0x4] sm:$0x1]
        %v326 = vld [vmem:[%s302 + $0x8] sm:$0xf]
        %v327 = vld [vmem:[%s302 + $0xc] sm:$0x1]
        %v328 = vld [vmem:[%s302 + $0x10] sm:$0xf]
        %v329 = vld [vmem:[%s302 + $0x14] sm:$0x1]
        %v330 = vld [vmem:[%s302 + $0x18] sm:$0xf]
        %v331 = vld [vmem:[%s302 + $0x1c] sm:$0x1]
        %v332 = vld [vmem:[%s302 + $0x20] sm:$0xf]
        %v333 = vld [vmem:[%s302 + $0x24] sm:$0x1]
        %v334 = vld [vmem:[%s302 + $0x28] sm:$0xf]
        %v335 = vld [vmem:[%s302 + $0x2c] sm:$0x1]
        %v336 = vld [vmem:[%s302 + $0x30] sm:$0xf]
        %v337 = vld [vmem:[%s302 + $0x34] sm:$0x1]
        %v338 = vld [vmem:[%s302 + $0x38] sm:$0xf]
        %v339 = vld [vmem:[%s302 + $0x3c] sm:$0x1]
        %v340 = vld [vmem:[%s302 + $0x40] sm:$0xf]
        %v341 = vld [vmem:[%s302 + $0x44] sm:$0x1]
        %v342 = vld [vmem:[%s307] sm:$0xf]
        %v343 = vld [vmem:[%s307 + $0x8] sm:$0xf]
        %v344 = vld [vmem:[%s307 + $0x10] sm:$0xf]
        %v345 = vld [vmem:[%s307 + $0x18] sm:$0xf]
        %v346 = vld [vmem:[%s307 + $0x20] sm:$0xf]
        %v347 = vld [vmem:[%s307 + $0x28] sm:$0xf]
        %v348 = vld [vmem:[%s307 + $0x30] sm:$0xf]
        %v349 = vld [vmem:[%s307 + $0x38] sm:$0xf]
        %v350 = vld [vmem:[%s307 + $0x40] sm:$0xf]
        %v351 = vld [vmem:[%s312] sm:$0xf]
        %v352 = vld [vmem:[%s312 + $0x4] sm:$0x1]
        %v353 = vld [vmem:[%s312 + $0x8] sm:$0xf]
        %v354 = vld [vmem:[%s312 + $0xc] sm:$0x1]
        %v355 = vld [vmem:[%s312 + $0x10] sm:$0xf]
        %v356 = vld [vmem:[%s312 + $0x14] sm:$0x1]
        %v357 = vld [vmem:[%s312 + $0x18] sm:$0xf]
        %v358 = vld [vmem:[%s312 + $0x1c] sm:$0x1]
        %v359 = vld [vmem:[%s312 + $0x20] sm:$0xf]
        %v360 = vld [vmem:[%s312 + $0x24] sm:$0x1]
        %v361 = vld [vmem:[%s312 + $0x28] sm:$0xf]
        %v362 = vld [vmem:[%s312 + $0x2c] sm:$0x1]
        %v363 = vld [vmem:[%s312 + $0x30] sm:$0xf]
        %v364 = vld [vmem:[%s312 + $0x34] sm:$0x1]
        %v365 = vld [vmem:[%s312 + $0x38] sm:$0xf]
        %v366 = vld [vmem:[%s312 + $0x3c] sm:$0x1]
        %v367 = vld [vmem:[%s317] sm:$0xf]
        %v368 = vld [vmem:[%s317 + $0x8] sm:$0xf]
        %v369 = vld [vmem:[%s317 + $0x10] sm:$0xf]
        %v370 = vld [vmem:[%s317 + $0x18] sm:$0xf]
        %v371 = vld [vmem:[%s317 + $0x20] sm:$0xf]
        %v372 = vld [vmem:[%s317 + $0x28] sm:$0xf]
        %v373 = vld [vmem:[%s317 + $0x30] sm:$0xf]
        %v374 = vld [vmem:[%s317 + $0x38] sm:$0xf]
        %v375 = vld [vmem:[%s4] sm:$0xf]
        %v376 = vld [vmem:[%s4 + $0x4] sm:$0xf]
        %v377 = vld [vmem:[%s4 + $0x8] sm:$0xf]
        %v378 = vld [vmem:[%s4 + $0xc] sm:$0xf]
        %v379 = vld [vmem:[%s4 + $0x10] sm:$0xf]
        %v380 = vld [vmem:[%s4 + $0x14] sm:$0xf]
        %v381 = vld [vmem:[%s4 + $0x18] sm:$0xf]
        %v382 = vld [vmem:[%s4 + $0x1c] sm:$0xf]
        %v383 = vld [vmem:[%s4 + $0x20] sm:$0xf]
        %v384 = vld [vmem:[%s4 + $0x24] sm:$0xf]
        %v385 = vld [vmem:[%s4 + $0x28] sm:$0xf]
        %v386 = vld [vmem:[%s4 + $0x2c] sm:$0xf]
        %v387 = vld [vmem:[%s4 + $0x30] sm:$0xf]
        %v388 = vld [vmem:[%s4 + $0x34] sm:$0xf]
        %v389 = vld [vmem:[%s4 + $0x38] sm:$0xf]
        %v390 = vld [vmem:[%s4 + $0x3c] sm:$0xf]
        %s391 = scalar_lea.vmem %s4, 64
        %v392 = vld [vmem:[%s391] sm:$0xf]
        %v393 = vld [vmem:[%s391 + $0x4] sm:$0xf]
        %v394 = vld [vmem:[%s391 + $0x8] sm:$0xf]
        %v395 = vld [vmem:[%s391 + $0xc] sm:$0xf]
        %v396 = vld [vmem:[%s391 + $0x10] sm:$0xf]
        %v397 = vld [vmem:[%s391 + $0x14] sm:$0xf]
        %v398 = vld [vmem:[%s391 + $0x18] sm:$0xf]
        %v399 = vld [vmem:[%s391 + $0x1c] sm:$0xf]
        %v400 = vld [vmem:[%s391 + $0x20] sm:$0xf]
        %v401 = vld [vmem:[%s391 + $0x24] sm:$0xf]
        %v402 = vld [vmem:[%s391 + $0x28] sm:$0xf]
        %v403 = vld [vmem:[%s391 + $0x2c] sm:$0xf]
        %v404 = vld [vmem:[%s391 + $0x30] sm:$0xf]
        %v405 = vld [vmem:[%s391 + $0x34] sm:$0xf]
        %v406 = vld [vmem:[%s391 + $0x38] sm:$0xf]
        %v407 = vld [vmem:[%s391 + $0x3c] sm:$0xf]
        %v416 = vunpack.c.l.b16 %v342
        %v417 = vunpack.c.l.b16 %v343
        %v418 = vunpack.c.l.b16 %v344
        %v419 = vunpack.c.l.b16 %v345
        %v420 = vunpack.c.l.b16 %v346
        %v421 = vunpack.c.l.b16 %v347
        %v422 = vunpack.c.l.b16 %v348
        %v423 = vunpack.c.l.b16 %v349
        %v424 = vpack.c.b16 %v417, %v416
        %v425 = vpack.c.b16 %v419, %v418
        %v426 = vpack.c.b16 %v421, %v420
        %v427 = vpack.c.b16 %v423, %v422
        %v448 = vunpack.c.l.b16 %v392
        %v449 = vunpack.c.l.b16 %v393
        %v450 = vunpack.c.l.b16 %v394
        %v451 = vunpack.c.l.b16 %v395
        %v452 = vunpack.c.l.b16 %v396
        %v453 = vunpack.c.l.b16 %v397
        %v454 = vunpack.c.l.b16 %v398
        %v455 = vunpack.c.l.b16 %v399
        %v456 = vunpack.c.l.b16 %v400
        %v457 = vunpack.c.l.b16 %v401
        %v458 = vunpack.c.l.b16 %v402
        %v459 = vunpack.c.l.b16 %v403
        %v460 = vunpack.c.l.b16 %v404
        %v461 = vunpack.c.l.b16 %v405
        %v462 = vunpack.c.l.b16 %v406
        %v463 = vunpack.c.l.b16 %v407
        %v464 = vpack.c.b16 %v449, %v448
        %v465 = vpack.c.b16 %v451, %v450
        %v466 = vpack.c.b16 %v453, %v452
        %v467 = vpack.c.b16 %v455, %v454
        %v468 = vpack.c.b16 %v457, %v456
        %v469 = vpack.c.b16 %v459, %v458
        %v470 = vpack.c.b16 %v461, %v460
        %v471 = vpack.c.b16 %v463, %v462
        %480 = vmatprep.subr.bf16.mxu0 0
        %481 = vmatpush1.bf16.msra.mxu0 %v464
        %482 = vmatprep.subr.bf16.mxu0 0
        %483 = vmatpush1.bf16.msra.mxu0 %v465
        %484 = vmatprep.subr.bf16.mxu0 0
        %485 = vmatpush1.bf16.msra.mxu0 %v466
        %486 = vmatprep.subr.bf16.mxu0 0
        %487 = vmatpush1.bf16.msra.mxu0 %v467
        %488 = vmatprep.subr.bf16.mxu0 0
        %489 = vmatpush1.bf16.msra.mxu0 %v468
        %490 = vmatprep.subr.bf16.mxu0 0
        %491 = vmatpush1.bf16.msra.mxu0 %v469
        %492 = vmatprep.subr.bf16.mxu0 0
        %493 = vmatpush1.bf16.msra.mxu0 %v470
        %494 = vmatprep.subr.bf16.mxu0 0
        %495 = vmatpush1.bf16.msra.mxu0 %v471
        %496 = vmatprep.subr.bf16.mxu0 0
        %497 = vmatpush1.bf16.msra.mxu0 0
        %498 = vmatprep.subr.bf16.mxu0 0
        %499 = vmatpush1.bf16.msra.mxu0 0
        %500 = vmatprep.subr.bf16.mxu0 0
        %501 = vmatpush1.bf16.msra.mxu0 0
        %502 = vmatprep.subr.bf16.mxu0 0
        %503 = vmatpush1.bf16.msra.mxu0 0
        %504 = vmatprep.subr.bf16.mxu0 0
        %505 = vmatpush1.bf16.msra.mxu0 0
        %506 = vmatprep.subr.bf16.mxu0 0
        %507 = vmatpush1.bf16.msra.mxu0 0
        %508 = vmatprep.subr.bf16.mxu0 0
        %509 = vmatpush1.bf16.msra.mxu0 0
        %510 = vmatprep.subr.bf16.mxu0 0
        %511 = vmatpush1.bf16.msra.mxu0 0
        %512 = vmatprep.mubr.bf16.mxu0 0
        %513 = vmatmul.mubr.bf16.gmra.mrb[0].mxu0 %v424
        %v514 = vpop.f32.mrb[0].mxu0
        %v515 = vadd.f32 0.0, %v514
        %v516 = vpop.f32.mrb[0].mxu0
        %v517 = vpop.f32.mrb[0].mxu0
        %v518 = vadd.f32 0.0, %v517
        %v519 = vpop.f32.mrb[0].mxu0
        %520 = vmatprep.mubr.bf16.mxu0 0
        %521 = vmatmul.mubr.bf16.gmra.mrb[0].mxu0 %v425
        %v522 = vpop.f32.mrb[0].mxu0
        %v523 = vadd.f32 0.0, %v522
        %v524 = vpop.f32.mrb[0].mxu0
        %v525 = vpop.f32.mrb[0].mxu0
        %v526 = vadd.f32 0.0, %v525
        %v527 = vpop.f32.mrb[0].mxu0
        %528 = vmatprep.mubr.bf16.mxu0 0
        %529 = vmatmul.mubr.bf16.gmra.mrb[0].mxu0 %v426
        %v530 = vpop.f32.mrb[0].mxu0
        %v531 = vadd.f32 0.0, %v530
        %v532 = vpop.f32.mrb[0].mxu0
        %v533 = vpop.f32.mrb[0].mxu0
        %v534 = vadd.f32 0.0, %v533
        %v535 = vpop.f32.mrb[0].mxu0
        %536 = vmatprep.mubr.bf16.mxu0 0
        %537 = vmatmul.mubr.bf16.gmra.mrb[0].mxu0 %v427
        %v538 = vpop.f32.mrb[0].mxu0
        %v539 = vadd.f32 0.0, %v538
        %v540 = vpop.f32.mrb[0].mxu0
        %v541 = vpop.f32.mrb[0].mxu0
        %v542 = vadd.f32 0.0, %v541
        %v543 = vpop.f32.mrb[0].mxu0
        %544 = vdwg.mxu0
        %v553 = vunpack.c.l.b16 %v324
        %v554 = vunpack.c.l.b16 %v326
        %v555 = vunpack.c.l.b16 %v328
        %v556 = vunpack.c.l.b16 %v330
        %v557 = vunpack.c.l.b16 %v332
        %v558 = vunpack.c.l.b16 %v334
        %v559 = vunpack.c.l.b16 %v336
        %v560 = vunpack.c.l.b16 %v338
        %v561 = vpack.c.b16 %v554, %v553
        %v562 = vpack.c.b16 %v556, %v555
        %v563 = vpack.c.b16 %v558, %v557
        %v564 = vpack.c.b16 %v560, %v559
        %v585 = vunpack.c.l.b16 %v375
        %v586 = vunpack.c.l.b16 %v376
        %v587 = vunpack.c.l.b16 %v377
        %v588 = vunpack.c.l.b16 %v378
        %v589 = vunpack.c.l.b16 %v379
        %v590 = vunpack.c.l.b16 %v380
        %v591 = vunpack.c.l.b16 %v381
        %v592 = vunpack.c.l.b16 %v382
        %v593 = vunpack.c.l.b16 %v383
        %v594 = vunpack.c.l.b16 %v384
        %v595 = vunpack.c.l.b16 %v385
        %v596 = vunpack.c.l.b16 %v386
        %v597 = vunpack.c.l.b16 %v387
        %v598 = vunpack.c.l.b16 %v388
        %v599 = vunpack.c.l.b16 %v389
        %v600 = vunpack.c.l.b16 %v390
        %v601 = vpack.c.b16 %v586, %v585
        %v602 = vpack.c.b16 %v588, %v587
        %v603 = vpack.c.b16 %v590, %v589
        %v604 = vpack.c.b16 %v592, %v591
        %v605 = vpack.c.b16 %v594, %v593
        %v606 = vpack.c.b16 %v596, %v595
        %v607 = vpack.c.b16 %v598, %v597
        %v608 = vpack.c.b16 %v600, %v599
        %617 = vmatprep.subr.bf16.mxu0 0
        %618 = vmatpush1.bf16.msra.mxu0 %v601
        %619 = vmatprep.subr.bf16.mxu0 0
        %620 = vmatpush1.bf16.msra.mxu0 %v602
        %621 = vmatprep.subr.bf16.mxu0 0
        %622 = vmatpush1.bf16.msra.mxu0 %v603
        %623 = vmatprep.subr.bf16.mxu0 0
        %624 = vmatpush1.bf16.msra.mxu0 %v604
        %625 = vmatprep.subr.bf16.mxu0 0
        %626 = vmatpush1.bf16.msra.mxu0 %v605
        %627 = vmatprep.subr.bf16.mxu0 0
        %628 = vmatpush1.bf16.msra.mxu0 %v606
        %629 = vmatprep.subr.bf16.mxu0 0
        %630 = vmatpush1.bf16.msra.mxu0 %v607
        %631 = vmatprep.subr.bf16.mxu0 0
        %632 = vmatpush1.bf16.msra.mxu0 %v608
        %633 = vmatprep.subr.bf16.mxu0 0
        %634 = vmatpush1.bf16.msra.mxu0 0
        %635 = vmatprep.subr.bf16.mxu0 0
        %636 = vmatpush1.bf16.msra.mxu0 0
        %637 = vmatprep.subr.bf16.mxu0 0
        %638 = vmatpush1.bf16.msra.mxu0 0
        %639 = vmatprep.subr.bf16.mxu0 0
        %640 = vmatpush1.bf16.msra.mxu0 0
        %641 = vmatprep.subr.bf16.mxu0 0
        %642 = vmatpush1.bf16.msra.mxu0 0
        %643 = vmatprep.subr.bf16.mxu0 0
        %644 = vmatpush1.bf16.msra.mxu0 0
        %645 = vmatprep.subr.bf16.mxu0 0
        %646 = vmatpush1.bf16.msra.mxu0 0
        %647 = vmatprep.subr.bf16.mxu0 0
        %648 = vmatpush1.bf16.msra.mxu0 0
        %649 = vmatprep.mubr.bf16.mxu0 0
        %650 = vmatmul.mubr.bf16.gmra.mrb[0].mxu0 %v561
        %v651 = vpop.f32.mrb[0].mxu0
        %v652 = vadd.f32 %v515, %v651
        %v653 = vpop.f32.mrb[0].mxu0
        %v654 = vpop.f32.mrb[0].mxu0
        %v655 = vadd.f32 %v518, %v654
        %v656 = vpop.f32.mrb[0].mxu0
        %657 = vmatprep.mubr.bf16.mxu0 0
        %658 = vmatmul.mubr.bf16.gmra.mrb[0].mxu0 %v562
        %v659 = vpop.f32.mrb[0].mxu0
        %v660 = vadd.f32 %v523, %v659
        %v661 = vpop.f32.mrb[0].mxu0
        %v662 = vpop.f32.mrb[0].mxu0
        %v663 = vadd.f32 %v526, %v662
        %v664 = vpop.f32.mrb[0].mxu0
        %665 = vmatprep.mubr.bf16.mxu0 0
        %666 = vmatmul.mubr.bf16.gmra.mrb[0].mxu0 %v563
        %v667 = vpop.f32.mrb[0].mxu0
        %v668 = vadd.f32 %v531, %v667
        %v669 = vpop.f32.mrb[0].mxu0
        %v670 = vpop.f32.mrb[0].mxu0
        %v671 = vadd.f32 %v534, %v670
        %v672 = vpop.f32.mrb[0].mxu0
        %673 = vmatprep.mubr.bf16.mxu0 0
        %674 = vmatmul.mubr.bf16.gmra.mrb[0].mxu0 %v564
        %v675 = vpop.f32.mrb[0].mxu0
        %v676 = vadd.f32 %v539, %v675
        %v677 = vpop.f32.mrb[0].mxu0
        %v678 = vpop.f32.mrb[0].mxu0
        %v679 = vadd.f32 %v542, %v678
        %v680 = vpop.f32.mrb[0].mxu0
        %681 = vdwg.mxu0
        %vm682 = vsmask.f32 3328
        %vm683 = vsmask.f32 7440
        %vm684 = vmor %vm682, %vm683
        %v686 = vshrl.u32 %v324, 16
        %v688 = vrot.slane %v686, 4
        %v689 = vshll.u32 %v324, 16
        %v691 = vrot.slane %v689, 5
        %v692 = vor.u32 %v688, %v691
        %v693 = vrot.slane %v692, 4
        %v695 = vshll.u32 %v325, 16
        %v697 = vrot.slane %v695, 5
        %v698 = vsel %vm684, %v693, %v697
        %v700 = vshrl.u32 %v326, 16
        %v702 = vrot.slane %v700, 4
        %v703 = vshll.u32 %v326, 16
        %v705 = vrot.slane %v703, 5
        %v706 = vor.u32 %v702, %v705
        %v707 = vrot.slane %v706, 4
        %v709 = vshll.u32 %v327, 16
        %v711 = vrot.slane %v709, 5
        %v712 = vsel %vm684, %v707, %v711
        %v714 = vshrl.u32 %v328, 16
        %v716 = vrot.slane %v714, 4
        %v717 = vshll.u32 %v328, 16
        %v719 = vrot.slane %v717, 5
        %v720 = vor.u32 %v716, %v719
        %v721 = vrot.slane %v720, 4
        %v723 = vshll.u32 %v329, 16
        %v725 = vrot.slane %v723, 5
        %v726 = vsel %vm684, %v721, %v725
        %v728 = vshrl.u32 %v330, 16
        %v730 = vrot.slane %v728, 4
        %v731 = vshll.u32 %v330, 16
        %v733 = vrot.slane %v731, 5
        %v734 = vor.u32 %v730, %v733
        %v735 = vrot.slane %v734, 4
        %v737 = vshll.u32 %v331, 16
        %v739 = vrot.slane %v737, 5
        %v740 = vsel %vm684, %v735, %v739
        %v742 = vshrl.u32 %v332, 16
        %v744 = vrot.slane %v742, 4
        %v745 = vshll.u32 %v332, 16
        %v747 = vrot.slane %v745, 5
        %v748 = vor.u32 %v744, %v747
        %v749 = vrot.slane %v748, 4
        %v751 = vshll.u32 %v333, 16
        %v753 = vrot.slane %v751, 5
        %v754 = vsel %vm684, %v749, %v753
        %v756 = vshrl.u32 %v334, 16
        %v758 = vrot.slane %v756, 4
        %v759 = vshll.u32 %v334, 16
        %v761 = vrot.slane %v759, 5
        %v762 = vor.u32 %v758, %v761
        %v763 = vrot.slane %v762, 4
        %v765 = vshll.u32 %v335, 16
        %v767 = vrot.slane %v765, 5
        %v768 = vsel %vm684, %v763, %v767
        %v770 = vshrl.u32 %v336, 16
        %v772 = vrot.slane %v770, 4
        %v773 = vshll.u32 %v336, 16
        %v775 = vrot.slane %v773, 5
        %v776 = vor.u32 %v772, %v775
        %v777 = vrot.slane %v776, 4
        %v779 = vshll.u32 %v337, 16
        %v781 = vrot.slane %v779, 5
        %v782 = vsel %vm684, %v777, %v781
        %v784 = vshrl.u32 %v338, 16
        %v786 = vrot.slane %v784, 4
        %v787 = vshll.u32 %v338, 16
        %v789 = vrot.slane %v787, 5
        %v790 = vor.u32 %v786, %v789
        %v791 = vrot.slane %v790, 4
        %v793 = vshll.u32 %v339, 16
        %v795 = vrot.slane %v793, 5
        %v796 = vsel %vm684, %v791, %v795
        %s797 = scalar_lea.vmem %s4, 128
        %v798 = vld [vmem:[%s797] sm:$0xf]
        %v799 = vld [vmem:[%s797 + $0x4] sm:$0xf]
        %v800 = vld [vmem:[%s797 + $0x8] sm:$0xf]
        %v801 = vld [vmem:[%s797 + $0xc] sm:$0xf]
        %v802 = vld [vmem:[%s797 + $0x10] sm:$0xf]
        %v803 = vld [vmem:[%s797 + $0x14] sm:$0xf]
        %v804 = vld [vmem:[%s797 + $0x18] sm:$0xf]
        %v805 = vld [vmem:[%s797 + $0x1c] sm:$0xf]
        %v806 = vld [vmem:[%s797 + $0x20] sm:$0xf]
        %v807 = vld [vmem:[%s797 + $0x24] sm:$0xf]
        %v808 = vld [vmem:[%s797 + $0x28] sm:$0xf]
        %v809 = vld [vmem:[%s797 + $0x2c] sm:$0xf]
        %v810 = vld [vmem:[%s797 + $0x30] sm:$0xf]
        %v811 = vld [vmem:[%s797 + $0x34] sm:$0xf]
        %v812 = vld [vmem:[%s797 + $0x38] sm:$0xf]
        %v813 = vld [vmem:[%s797 + $0x3c] sm:$0xf]
        %v814 = vunpack.c.l.b16 %v698
        %v815 = vunpack.c.l.b16 %v712
        %v816 = vunpack.c.l.b16 %v726
        %v817 = vunpack.c.l.b16 %v740
        %v818 = vunpack.c.l.b16 %v754
        %v819 = vunpack.c.l.b16 %v768
        %v820 = vunpack.c.l.b16 %v782
        %v821 = vunpack.c.l.b16 %v796
        %v822 = vpack.c.b16 %v815, %v814
        %v823 = vpack.c.b16 %v817, %v816
        %v824 = vpack.c.b16 %v819, %v818
        %v825 = vpack.c.b16 %v821, %v820
        %v846 = vunpack.c.l.b16 %v798
        %v847 = vunpack.c.l.b16 %v799
        %v848 = vunpack.c.l.b16 %v800
        %v849 = vunpack.c.l.b16 %v801
        %v850 = vunpack.c.l.b16 %v802
        %v851 = vunpack.c.l.b16 %v803
        %v852 = vunpack.c.l.b16 %v804
        %v853 = vunpack.c.l.b16 %v805
        %v854 = vunpack.c.l.b16 %v806
        %v855 = vunpack.c.l.b16 %v807
        %v856 = vunpack.c.l.b16 %v808
        %v857 = vunpack.c.l.b16 %v809
        %v858 = vunpack.c.l.b16 %v810
        %v859 = vunpack.c.l.b16 %v811
        %v860 = vunpack.c.l.b16 %v812
        %v861 = vunpack.c.l.b16 %v813
        %v862 = vpack.c.b16 %v847, %v846
        %v863 = vpack.c.b16 %v849, %v848
        %v864 = vpack.c.b16 %v851, %v850
        %v865 = vpack.c.b16 %v853, %v852
        %v866 = vpack.c.b16 %v855, %v854
        %v867 = vpack.c.b16 %v857, %v856
        %v868 = vpack.c.b16 %v859, %v858
        %v869 = vpack.c.b16 %v861, %v860
        %878 = vmatprep.subr.bf16.mxu0 0
        %879 = vmatpush1.bf16.msra.mxu0 %v862
        %880 = vmatprep.subr.bf16.mxu0 0
        %881 = vmatpush1.bf16.msra.mxu0 %v863
        %882 = vmatprep.subr.bf16.mxu0 0
        %883 = vmatpush1.bf16.msra.mxu0 %v864
        %884 = vmatprep.subr.bf16.mxu0 0
        %885 = vmatpush1.bf16.msra.mxu0 %v865
        %886 = vmatprep.subr.bf16.mxu0 0
        %887 = vmatpush1.bf16.msra.mxu0 %v866
        %888 = vmatprep.subr.bf16.mxu0 0
        %889 = vmatpush1.bf16.msra.mxu0 %v867
        %890 = vmatprep.subr.bf16.mxu0 0
        %891 = vmatpush1.bf16.msra.mxu0 %v868
        %892 = vmatprep.subr.bf16.mxu0 0
        %893 = vmatpush1.bf16.msra.mxu0 %v869
        %894 = vmatprep.subr.bf16.mxu0 0
        %895 = vmatpush1.bf16.msra.mxu0 0
        %896 = vmatprep.subr.bf16.mxu0 0
        %897 = vmatpush1.bf16.msra.mxu0 0
        %898 = vmatprep.subr.bf16.mxu0 0
        %899 = vmatpush1.bf16.msra.mxu0 0
        %900 = vmatprep.subr.bf16.mxu0 0
        %901 = vmatpush1.bf16.msra.mxu0 0
        %902 = vmatprep.subr.bf16.mxu0 0
        %903 = vmatpush1.bf16.msra.mxu0 0
        %904 = vmatprep.subr.bf16.mxu0 0
        %905 = vmatpush1.bf16.msra.mxu0 0
        %906 = vmatprep.subr.bf16.mxu0 0
        %907 = vmatpush1.bf16.msra.mxu0 0
        %908 = vmatprep.subr.bf16.mxu0 0
        %909 = vmatpush1.bf16.msra.mxu0 0
        %910 = vmatprep.mubr.bf16.mxu0 0
        %911 = vmatmul.mubr.bf16.gmra.mrb[0].mxu0 %v822
        %v912 = vpop.f32.mrb[0].mxu0
        %v913 = vadd.f32 0.0, %v912
        %v914 = vpop.f32.mrb[0].mxu0
        %v915 = vpop.f32.mrb[0].mxu0
        %v916 = vadd.f32 0.0, %v915
        %v917 = vpop.f32.mrb[0].mxu0
        %918 = vmatprep.mubr.bf16.mxu0 0
        %919 = vmatmul.mubr.bf16.gmra.mrb[0].mxu0 %v823
        %v920 = vpop.f32.mrb[0].mxu0
        %v921 = vadd.f32 0.0, %v920
        %v922 = vpop.f32.mrb[0].mxu0
        %v923 = vpop.f32.mrb[0].mxu0
        %v924 = vadd.f32 0.0, %v923
        %v925 = vpop.f32.mrb[0].mxu0
        %926 = vmatprep.mubr.bf16.mxu0 0
        %927 = vmatmul.mubr.bf16.gmra.mrb[0].mxu0 %v824
        %v928 = vpop.f32.mrb[0].mxu0
        %v929 = vadd.f32 0.0, %v928
        %v930 = vpop.f32.mrb[0].mxu0
        %v931 = vpop.f32.mrb[0].mxu0
        %v932 = vadd.f32 0.0, %v931
        %v933 = vpop.f32.mrb[0].mxu0
        %934 = vmatprep.mubr.bf16.mxu0 0
        %935 = vmatmul.mubr.bf16.gmra.mrb[0].mxu0 %v825
        %v936 = vpop.f32.mrb[0].mxu0
        %v937 = vadd.f32 0.0, %v936
        %v938 = vpop.f32.mrb[0].mxu0
        %v939 = vpop.f32.mrb[0].mxu0
        %v940 = vadd.f32 0.0, %v939
        %v941 = vpop.f32.mrb[0].mxu0
        %942 = vdwg.mxu0
        %v943 = vadd.f32 %v652, %v913
        %v944 = vadd.f32 %v655, %v916
        %v945 = vadd.f32 %v660, %v921
        %v946 = vadd.f32 %v663, %v924
        %v947 = vadd.f32 %v668, %v929
        %v948 = vadd.f32 %v671, %v932
        %v949 = vadd.f32 %v676, %v937
        %v950 = vadd.f32 %v679, %v940
        %s951 = scalar_lea.vmem %s4, 192
        %v952 = vld [vmem:[%s951] sm:$0xf]
        %v953 = vld [vmem:[%s951 + $0x4] sm:$0xf]
        %v954 = vld [vmem:[%s951 + $0x8] sm:$0xf]
        %v955 = vld [vmem:[%s951 + $0xc] sm:$0xf]
        %v956 = vld [vmem:[%s951 + $0x10] sm:$0xf]
        %v957 = vld [vmem:[%s951 + $0x14] sm:$0xf]
        %v958 = vld [vmem:[%s951 + $0x18] sm:$0xf]
        %v959 = vld [vmem:[%s951 + $0x1c] sm:$0xf]
        %v960 = vld [vmem:[%s951 + $0x20] sm:$0xf]
        %v961 = vld [vmem:[%s951 + $0x24] sm:$0xf]
        %v962 = vld [vmem:[%s951 + $0x28] sm:$0xf]
        %v963 = vld [vmem:[%s951 + $0x2c] sm:$0xf]
        %v964 = vld [vmem:[%s951 + $0x30] sm:$0xf]
        %v965 = vld [vmem:[%s951 + $0x34] sm:$0xf]
        %v966 = vld [vmem:[%s951 + $0x38] sm:$0xf]
        %v967 = vld [vmem:[%s951 + $0x3c] sm:$0xf]
        %v976 = vunpack.c.l.b16 %v351
        %v977 = vunpack.c.l.b16 %v353
        %v978 = vunpack.c.l.b16 %v355
        %v979 = vunpack.c.l.b16 %v357
        %v980 = vunpack.c.l.b16 %v359
        %v981 = vunpack.c.l.b16 %v361
        %v982 = vunpack.c.l.b16 %v363
        %v983 = vunpack.c.l.b16 %v365
        %v984 = vpack.c.b16 %v977, %v976
        %v985 = vpack.c.b16 %v979, %v978
        %v986 = vpack.c.b16 %v981, %v980
        %v987 = vpack.c.b16 %v983, %v982
        %v1008 = vunpack.c.l.b16 %v952
        %v1009 = vunpack.c.l.b16 %v953
        %v1010 = vunpack.c.l.b16 %v954
        %v1011 = vunpack.c.l.b16 %v955
        %v1012 = vunpack.c.l.b16 %v956
        %v1013 = vunpack.c.l.b16 %v957
        %v1014 = vunpack.c.l.b16 %v958
        %v1015 = vunpack.c.l.b16 %v959
        %v1016 = vunpack.c.l.b16 %v960
        %v1017 = vunpack.c.l.b16 %v961
        %v1018 = vunpack.c.l.b16 %v962
        %v1019 = vunpack.c.l.b16 %v963
        %v1020 = vunpack.c.l.b16 %v964
        %v1021 = vunpack.c.l.b16 %v965
        %v1022 = vunpack.c.l.b16 %v966
        %v1023 = vunpack.c.l.b16 %v967
        %v1024 = vpack.c.b16 %v1009, %v1008
        %v1025 = vpack.c.b16 %v1011, %v1010
        %v1026 = vpack.c.b16 %v1013, %v1012
        %v1027 = vpack.c.b16 %v1015, %v1014
        %v1028 = vpack.c.b16 %v1017, %v1016
        %v1029 = vpack.c.b16 %v1019, %v1018
        %v1030 = vpack.c.b16 %v1021, %v1020
        %v1031 = vpack.c.b16 %v1023, %v1022
        %1040 = vmatprep.subr.bf16.mxu0 0
        %1041 = vmatpush1.bf16.msra.mxu0 %v1024
        %1042 = vmatprep.subr.bf16.mxu0 0
        %1043 = vmatpush1.bf16.msra.mxu0 %v1025
        %1044 = vmatprep.subr.bf16.mxu0 0
        %1045 = vmatpush1.bf16.msra.mxu0 %v1026
        %1046 = vmatprep.subr.bf16.mxu0 0
        %1047 = vmatpush1.bf16.msra.mxu0 %v1027
        %1048 = vmatprep.subr.bf16.mxu0 0
        %1049 = vmatpush1.bf16.msra.mxu0 %v1028
        %1050 = vmatprep.subr.bf16.mxu0 0
        %1051 = vmatpush1.bf16.msra.mxu0 %v1029
        %1052 = vmatprep.subr.bf16.mxu0 0
        %1053 = vmatpush1.bf16.msra.mxu0 %v1030
        %1054 = vmatprep.subr.bf16.mxu0 0
        %1055 = vmatpush1.bf16.msra.mxu0 %v1031
        %1056 = vmatprep.subr.bf16.mxu0 0
        %1057 = vmatpush1.bf16.msra.mxu0 0
        %1058 = vmatprep.subr.bf16.mxu0 0
        %1059 = vmatpush1.bf16.msra.mxu0 0
        %1060 = vmatprep.subr.bf16.mxu0 0
        %1061 = vmatpush1.bf16.msra.mxu0 0
        %1062 = vmatprep.subr.bf16.mxu0 0
        %1063 = vmatpush1.bf16.msra.mxu0 0
        %1064 = vmatprep.subr.bf16.mxu0 0
        %1065 = vmatpush1.bf16.msra.mxu0 0
        %1066 = vmatprep.subr.bf16.mxu0 0
        %1067 = vmatpush1.bf16.msra.mxu0 0
        %1068 = vmatprep.subr.bf16.mxu0 0
        %1069 = vmatpush1.bf16.msra.mxu0 0
        %1070 = vmatprep.subr.bf16.mxu0 0
        %1071 = vmatpush1.bf16.msra.mxu0 0
        %1072 = vmatprep.mubr.bf16.mxu0 0
        %1073 = vmatmul.mubr.bf16.gmra.mrb[0].mxu0 %v984
        %v1074 = vpop.f32.mrb[0].mxu0
        %v1075 = vadd.f32 0.0, %v1074
        %v1076 = vpop.f32.mrb[0].mxu0
        %v1077 = vpop.f32.mrb[0].mxu0
        %v1078 = vadd.f32 0.0, %v1077
        %v1079 = vpop.f32.mrb[0].mxu0
        %1080 = vmatprep.mubr.bf16.mxu0 0
        %1081 = vmatmul.mubr.bf16.gmra.mrb[0].mxu0 %v985
        %v1082 = vpop.f32.mrb[0].mxu0
        %v1083 = vadd.f32 0.0, %v1082
        %v1084 = vpop.f32.mrb[0].mxu0
        %v1085 = vpop.f32.mrb[0].mxu0
        %v1086 = vadd.f32 0.0, %v1085
        %v1087 = vpop.f32.mrb[0].mxu0
        %1088 = vmatprep.mubr.bf16.mxu0 0
        %1089 = vmatmul.mubr.bf16.gmra.mrb[0].mxu0 %v986
        %v1090 = vpop.f32.mrb[0].mxu0
        %v1091 = vadd.f32 0.0, %v1090
        %v1092 = vpop.f32.mrb[0].mxu0
        %v1093 = vpop.f32.mrb[0].mxu0
        %v1094 = vadd.f32 0.0, %v1093
        %v1095 = vpop.f32.mrb[0].mxu0
        %1096 = vmatprep.mubr.bf16.mxu0 0
        %1097 = vmatmul.mubr.bf16.gmra.mrb[0].mxu0 %v987
        %v1098 = vpop.f32.mrb[0].mxu0
        %v1099 = vadd.f32 0.0, %v1098
        %v1100 = vpop.f32.mrb[0].mxu0
        %v1101 = vpop.f32.mrb[0].mxu0
        %v1102 = vadd.f32 0.0, %v1101
        %v1103 = vpop.f32.mrb[0].mxu0
        %1104 = vdwg.mxu0
        %v1105 = vadd.f32 %v943, %v1075
        %v1106 = vadd.f32 %v944, %v1078
        %v1107 = vadd.f32 %v945, %v1083
        %v1108 = vadd.f32 %v946, %v1086
        %v1109 = vadd.f32 %v947, %v1091
        %v1110 = vadd.f32 %v948, %v1094
        %v1111 = vadd.f32 %v949, %v1099
        %v1112 = vadd.f32 %v950, %v1102
        %s1113 = scalar_lea.vmem %s4, 256
        %v1114 = vld [vmem:[%s1113] sm:$0xf]
        %v1115 = vld [vmem:[%s1113 + $0x4] sm:$0xf]
        %v1116 = vld [vmem:[%s1113 + $0x8] sm:$0xf]
        %v1117 = vld [vmem:[%s1113 + $0xc] sm:$0xf]
        %v1118 = vld [vmem:[%s1113 + $0x10] sm:$0xf]
        %v1119 = vld [vmem:[%s1113 + $0x14] sm:$0xf]
        %v1120 = vld [vmem:[%s1113 + $0x18] sm:$0xf]
        %v1121 = vld [vmem:[%s1113 + $0x1c] sm:$0xf]
        %v1122 = vld [vmem:[%s1113 + $0x20] sm:$0xf]
        %v1123 = vld [vmem:[%s1113 + $0x24] sm:$0xf]
        %v1124 = vld [vmem:[%s1113 + $0x28] sm:$0xf]
        %v1125 = vld [vmem:[%s1113 + $0x2c] sm:$0xf]
        %v1126 = vld [vmem:[%s1113 + $0x30] sm:$0xf]
        %v1127 = vld [vmem:[%s1113 + $0x34] sm:$0xf]
        %v1128 = vld [vmem:[%s1113 + $0x38] sm:$0xf]
        %v1129 = vld [vmem:[%s1113 + $0x3c] sm:$0xf]
        %v1138 = vunpack.c.l.b16 %v367
        %v1139 = vunpack.c.l.b16 %v368
        %v1140 = vunpack.c.l.b16 %v369
        %v1141 = vunpack.c.l.b16 %v370
        %v1142 = vunpack.c.l.b16 %v371
        %v1143 = vunpack.c.l.b16 %v372
        %v1144 = vunpack.c.l.b16 %v373
        %v1145 = vunpack.c.l.b16 %v374
        %v1146 = vpack.c.b16 %v1139, %v1138
        %v1147 = vpack.c.b16 %v1141, %v1140
        %v1148 = vpack.c.b16 %v1143, %v1142
        %v1149 = vpack.c.b16 %v1145, %v1144
        %v1170 = vunpack.c.l.b16 %v1114
        %v1171 = vunpack.c.l.b16 %v1115
        %v1172 = vunpack.c.l.b16 %v1116
        %v1173 = vunpack.c.l.b16 %v1117
        %v1174 = vunpack.c.l.b16 %v1118
        %v1175 = vunpack.c.l.b16 %v1119
        %v1176 = vunpack.c.l.b16 %v1120
        %v1177 = vunpack.c.l.b16 %v1121
        %v1178 = vunpack.c.l.b16 %v1122
        %v1179 = vunpack.c.l.b16 %v1123
        %v1180 = vunpack.c.l.b16 %v1124
        %v1181 = vunpack.c.l.b16 %v1125
        %v1182 = vunpack.c.l.b16 %v1126
        %v1183 = vunpack.c.l.b16 %v1127
        %v1184 = vunpack.c.l.b16 %v1128
        %v1185 = vunpack.c.l.b16 %v1129
        %v1186 = vpack.c.b16 %v1171, %v1170
        %v1187 = vpack.c.b16 %v1173, %v1172
        %v1188 = vpack.c.b16 %v1175, %v1174
        %v1189 = vpack.c.b16 %v1177, %v1176
        %v1190 = vpack.c.b16 %v1179, %v1178
        %v1191 = vpack.c.b16 %v1181, %v1180
        %v1192 = vpack.c.b16 %v1183, %v1182
        %v1193 = vpack.c.b16 %v1185, %v1184
        %1202 = vmatprep.subr.bf16.mxu0 0
        %1203 = vmatpush1.bf16.msra.mxu0 %v1186
        %1204 = vmatprep.subr.bf16.mxu0 0
        %1205 = vmatpush1.bf16.msra.mxu0 %v1187
        %1206 = vmatprep.subr.bf16.mxu0 0
        %1207 = vmatpush1.bf16.msra.mxu0 %v1188
        %1208 = vmatprep.subr.bf16.mxu0 0
        %1209 = vmatpush1.bf16.msra.mxu0 %v1189
        %1210 = vmatprep.subr.bf16.mxu0 0
        %1211 = vmatpush1.bf16.msra.mxu0 %v1190
        %1212 = vmatprep.subr.bf16.mxu0 0
        %1213 = vmatpush1.bf16.msra.mxu0 %v1191
        %1214 = vmatprep.subr.bf16.mxu0 0
        %1215 = vmatpush1.bf16.msra.mxu0 %v1192
        %1216 = vmatprep.subr.bf16.mxu0 0
        %1217 = vmatpush1.bf16.msra.mxu0 %v1193
        %1218 = vmatprep.subr.bf16.mxu0 0
        %1219 = vmatpush1.bf16.msra.mxu0 0
        %1220 = vmatprep.subr.bf16.mxu0 0
        %1221 = vmatpush1.bf16.msra.mxu0 0
        %1222 = vmatprep.subr.bf16.mxu0 0
        %1223 = vmatpush1.bf16.msra.mxu0 0
        %1224 = vmatprep.subr.bf16.mxu0 0
        %1225 = vmatpush1.bf16.msra.mxu0 0
        %1226 = vmatprep.subr.bf16.mxu0 0
        %1227 = vmatpush1.bf16.msra.mxu0 0
        %1228 = vmatprep.subr.bf16.mxu0 0
        %1229 = vmatpush1.bf16.msra.mxu0 0
        %1230 = vmatprep.subr.bf16.mxu0 0
        %1231 = vmatpush1.bf16.msra.mxu0 0
        %1232 = vmatprep.subr.bf16.mxu0 0
        %1233 = vmatpush1.bf16.msra.mxu0 0
        %1234 = vmatprep.mubr.bf16.mxu0 0
        %1235 = vmatmul.mubr.bf16.gmra.mrb[0].mxu0 %v1146
        %v1236 = vpop.f32.mrb[0].mxu0
        %v1237 = vadd.f32 0.0, %v1236
        %v1238 = vpop.f32.mrb[0].mxu0
        %v1239 = vpop.f32.mrb[0].mxu0
        %v1240 = vadd.f32 0.0, %v1239
        %v1241 = vpop.f32.mrb[0].mxu0
        %1242 = vmatprep.mubr.bf16.mxu0 0
        %1243 = vmatmul.mubr.bf16.gmra.mrb[0].mxu0 %v1147
        %v1244 = vpop.f32.mrb[0].mxu0
        %v1245 = vadd.f32 0.0, %v1244
        %v1246 = vpop.f32.mrb[0].mxu0
        %v1247 = vpop.f32.mrb[0].mxu0
        %v1248 = vadd.f32 0.0, %v1247
        %v1249 = vpop.f32.mrb[0].mxu0
        %1250 = vmatprep.mubr.bf16.mxu0 0
        %1251 = vmatmul.mubr.bf16.gmra.mrb[0].mxu0 %v1148
        %v1252 = vpop.f32.mrb[0].mxu0
        %v1253 = vadd.f32 0.0, %v1252
        %v1254 = vpop.f32.mrb[0].mxu0
        %v1255 = vpop.f32.mrb[0].mxu0
        %v1256 = vadd.f32 0.0, %v1255
        %v1257 = vpop.f32.mrb[0].mxu0
        %1258 = vmatprep.mubr.bf16.mxu0 0
        %1259 = vmatmul.mubr.bf16.gmra.mrb[0].mxu0 %v1149
        %v1260 = vpop.f32.mrb[0].mxu0
        %v1261 = vadd.f32 0.0, %v1260
        %v1262 = vpop.f32.mrb[0].mxu0
        %v1263 = vpop.f32.mrb[0].mxu0
        %v1264 = vadd.f32 0.0, %v1263
        %v1265 = vpop.f32.mrb[0].mxu0
        %1266 = vdwg.mxu0
        %v1267 = vadd.f32 %v1105, %v1237
        %v1268 = vadd.f32 %v1106, %v1240
        %v1269 = vadd.f32 %v1107, %v1245
        %v1270 = vadd.f32 %v1108, %v1248
        %v1271 = vadd.f32 %v1109, %v1253
        %v1272 = vadd.f32 %v1110, %v1256
        %v1273 = vadd.f32 %v1111, %v1261
        %v1274 = vadd.f32 %v1112, %v1264
        %v1276 = vshrl.u32 %v351, 16
        %v1278 = vrot.slane %v1276, 4
        %v1279 = vshll.u32 %v351, 16
        %v1281 = vrot.slane %v1279, 5
        %v1282 = vor.u32 %v1278, %v1281
        %v1283 = vrot.slane %v1282, 4
        %v1285 = vshll.u32 %v352, 16
        %v1287 = vrot.slane %v1285, 5
        %v1288 = vsel %vm684, %v1283, %v1287
        %v1290 = vshrl.u32 %v353, 16
        %v1292 = vrot.slane %v1290, 4
        %v1293 = vshll.u32 %v353, 16
        %v1295 = vrot.slane %v1293, 5
        %v1296 = vor.u32 %v1292, %v1295
        %v1297 = vrot.slane %v1296, 4
        %v1299 = vshll.u32 %v354, 16
        %v1301 = vrot.slane %v1299, 5
        %v1302 = vsel %vm684, %v1297, %v1301
        %v1304 = vshrl.u32 %v355, 16
        %v1306 = vrot.slane %v1304, 4
        %v1307 = vshll.u32 %v355, 16
        %v1309 = vrot.slane %v1307, 5
        %v1310 = vor.u32 %v1306, %v1309
        %v1311 = vrot.slane %v1310, 4
        %v1313 = vshll.u32 %v356, 16
        %v1315 = vrot.slane %v1313, 5
        %v1316 = vsel %vm684, %v1311, %v1315
        %v1318 = vshrl.u32 %v357, 16
        %v1320 = vrot.slane %v1318, 4
        %v1321 = vshll.u32 %v357, 16
        %v1323 = vrot.slane %v1321, 5
        %v1324 = vor.u32 %v1320, %v1323
        %v1325 = vrot.slane %v1324, 4
        %v1327 = vshll.u32 %v358, 16
        %v1329 = vrot.slane %v1327, 5
        %v1330 = vsel %vm684, %v1325, %v1329
        %v1332 = vshrl.u32 %v359, 16
        %v1334 = vrot.slane %v1332, 4
        %v1335 = vshll.u32 %v359, 16
        %v1337 = vrot.slane %v1335, 5
        %v1338 = vor.u32 %v1334, %v1337
        %v1339 = vrot.slane %v1338, 4
        %v1341 = vshll.u32 %v360, 16
        %v1343 = vrot.slane %v1341, 5
        %v1344 = vsel %vm684, %v1339, %v1343
        %v1346 = vshrl.u32 %v361, 16
        %v1348 = vrot.slane %v1346, 4
        %v1349 = vshll.u32 %v361, 16
        %v1351 = vrot.slane %v1349, 5
        %v1352 = vor.u32 %v1348, %v1351
        %v1353 = vrot.slane %v1352, 4
        %v1355 = vshll.u32 %v362, 16
        %v1357 = vrot.slane %v1355, 5
        %v1358 = vsel %vm684, %v1353, %v1357
        %v1360 = vshrl.u32 %v363, 16
        %v1362 = vrot.slane %v1360, 4
        %v1363 = vshll.u32 %v363, 16
        %v1365 = vrot.slane %v1363, 5
        %v1366 = vor.u32 %v1362, %v1365
        %v1367 = vrot.slane %v1366, 4
        %v1369 = vshll.u32 %v364, 16
        %v1371 = vrot.slane %v1369, 5
        %v1372 = vsel %vm684, %v1367, %v1371
        %v1374 = vshrl.u32 %v365, 16
        %v1376 = vrot.slane %v1374, 4
        %v1377 = vshll.u32 %v365, 16
        %v1379 = vrot.slane %v1377, 5
        %v1380 = vor.u32 %v1376, %v1379
        %v1381 = vrot.slane %v1380, 4
        %v1383 = vshll.u32 %v366, 16
        %v1385 = vrot.slane %v1383, 5
        %v1386 = vsel %vm684, %v1381, %v1385
        %s1387 = scalar_lea.vmem %s4, 320
        %v1388 = vld [vmem:[%s1387] sm:$0xf]
        %v1389 = vld [vmem:[%s1387 + $0x4] sm:$0xf]
        %v1390 = vld [vmem:[%s1387 + $0x8] sm:$0xf]
        %v1391 = vld [vmem:[%s1387 + $0xc] sm:$0xf]
        %v1392 = vld [vmem:[%s1387 + $0x10] sm:$0xf]
        %v1393 = vld [vmem:[%s1387 + $0x14] sm:$0xf]
        %v1394 = vld [vmem:[%s1387 + $0x18] sm:$0xf]
        %v1395 = vld [vmem:[%s1387 + $0x1c] sm:$0xf]
        %v1396 = vld [vmem:[%s1387 + $0x20] sm:$0xf]
        %v1397 = vld [vmem:[%s1387 + $0x24] sm:$0xf]
        %v1398 = vld [vmem:[%s1387 + $0x28] sm:$0xf]
        %v1399 = vld [vmem:[%s1387 + $0x2c] sm:$0xf]
        %v1400 = vld [vmem:[%s1387 + $0x30] sm:$0xf]
        %v1401 = vld [vmem:[%s1387 + $0x34] sm:$0xf]
        %v1402 = vld [vmem:[%s1387 + $0x38] sm:$0xf]
        %v1403 = vld [vmem:[%s1387 + $0x3c] sm:$0xf]
        %v1404 = vunpack.c.l.b16 %v1288
        %v1405 = vunpack.c.l.b16 %v1302
        %v1406 = vunpack.c.l.b16 %v1316
        %v1407 = vunpack.c.l.b16 %v1330
        %v1408 = vunpack.c.l.b16 %v1344
        %v1409 = vunpack.c.l.b16 %v1358
        %v1410 = vunpack.c.l.b16 %v1372
        %v1411 = vunpack.c.l.b16 %v1386
        %v1412 = vpack.c.b16 %v1405, %v1404
        %v1413 = vpack.c.b16 %v1407, %v1406
        %v1414 = vpack.c.b16 %v1409, %v1408
        %v1415 = vpack.c.b16 %v1411, %v1410
        %v1436 = vunpack.c.l.b16 %v1388
        %v1437 = vunpack.c.l.b16 %v1389
        %v1438 = vunpack.c.l.b16 %v1390
        %v1439 = vunpack.c.l.b16 %v1391
        %v1440 = vunpack.c.l.b16 %v1392
        %v1441 = vunpack.c.l.b16 %v1393
        %v1442 = vunpack.c.l.b16 %v1394
        %v1443 = vunpack.c.l.b16 %v1395
        %v1444 = vunpack.c.l.b16 %v1396
        %v1445 = vunpack.c.l.b16 %v1397
        %v1446 = vunpack.c.l.b16 %v1398
        %v1447 = vunpack.c.l.b16 %v1399
        %v1448 = vunpack.c.l.b16 %v1400
        %v1449 = vunpack.c.l.b16 %v1401
        %v1450 = vunpack.c.l.b16 %v1402
        %v1451 = vunpack.c.l.b16 %v1403
        %v1452 = vpack.c.b16 %v1437, %v1436
        %v1453 = vpack.c.b16 %v1439, %v1438
        %v1454 = vpack.c.b16 %v1441, %v1440
        %v1455 = vpack.c.b16 %v1443, %v1442
        %v1456 = vpack.c.b16 %v1445, %v1444
        %v1457 = vpack.c.b16 %v1447, %v1446
        %v1458 = vpack.c.b16 %v1449, %v1448
        %v1459 = vpack.c.b16 %v1451, %v1450
        %1468 = vmatprep.subr.bf16.mxu0 0
        %1469 = vmatpush1.bf16.msra.mxu0 %v1452
        %1470 = vmatprep.subr.bf16.mxu0 0
        %1471 = vmatpush1.bf16.msra.mxu0 %v1453
        %1472 = vmatprep.subr.bf16.mxu0 0
        %1473 = vmatpush1.bf16.msra.mxu0 %v1454
        %1474 = vmatprep.subr.bf16.mxu0 0
        %1475 = vmatpush1.bf16.msra.mxu0 %v1455
        %1476 = vmatprep.subr.bf16.mxu0 0
        %1477 = vmatpush1.bf16.msra.mxu0 %v1456
        %1478 = vmatprep.subr.bf16.mxu0 0
        %1479 = vmatpush1.bf16.msra.mxu0 %v1457
        %1480 = vmatprep.subr.bf16.mxu0 0
        %1481 = vmatpush1.bf16.msra.mxu0 %v1458
        %1482 = vmatprep.subr.bf16.mxu0 0
        %1483 = vmatpush1.bf16.msra.mxu0 %v1459
        %1484 = vmatprep.subr.bf16.mxu0 0
        %1485 = vmatpush1.bf16.msra.mxu0 0
        %1486 = vmatprep.subr.bf16.mxu0 0
        %1487 = vmatpush1.bf16.msra.mxu0 0
        %1488 = vmatprep.subr.bf16.mxu0 0
        %1489 = vmatpush1.bf16.msra.mxu0 0
        %1490 = vmatprep.subr.bf16.mxu0 0
        %1491 = vmatpush1.bf16.msra.mxu0 0
        %1492 = vmatprep.subr.bf16.mxu0 0
        %1493 = vmatpush1.bf16.msra.mxu0 0
        %1494 = vmatprep.subr.bf16.mxu0 0
        %1495 = vmatpush1.bf16.msra.mxu0 0
        %1496 = vmatprep.subr.bf16.mxu0 0
        %1497 = vmatpush1.bf16.msra.mxu0 0
        %1498 = vmatprep.subr.bf16.mxu0 0
        %1499 = vmatpush1.bf16.msra.mxu0 0
        %1500 = vmatprep.mubr.bf16.mxu0 0
        %1501 = vmatmul.mubr.bf16.gmra.mrb[0].mxu0 %v1412
        %v1502 = vpop.f32.mrb[0].mxu0
        %v1503 = vadd.f32 0.0, %v1502
        %v1504 = vpop.f32.mrb[0].mxu0
        %v1505 = vpop.f32.mrb[0].mxu0
        %v1506 = vadd.f32 0.0, %v1505
        %v1507 = vpop.f32.mrb[0].mxu0
        %1508 = vmatprep.mubr.bf16.mxu0 0
        %1509 = vmatmul.mubr.bf16.gmra.mrb[0].mxu0 %v1413
        %v1510 = vpop.f32.mrb[0].mxu0
        %v1511 = vadd.f32 0.0, %v1510
        %v1512 = vpop.f32.mrb[0].mxu0
        %v1513 = vpop.f32.mrb[0].mxu0
        %v1514 = vadd.f32 0.0, %v1513
        %v1515 = vpop.f32.mrb[0].mxu0
        %1516 = vmatprep.mubr.bf16.mxu0 0
        %1517 = vmatmul.mubr.bf16.gmra.mrb[0].mxu0 %v1414
        %v1518 = vpop.f32.mrb[0].mxu0
        %v1519 = vadd.f32 0.0, %v1518
        %v1520 = vpop.f32.mrb[0].mxu0
        %v1521 = vpop.f32.mrb[0].mxu0
        %v1522 = vadd.f32 0.0, %v1521
        %v1523 = vpop.f32.mrb[0].mxu0
        %1524 = vmatprep.mubr.bf16.mxu0 0
        %1525 = vmatmul.mubr.bf16.gmra.mrb[0].mxu0 %v1415
        %v1526 = vpop.f32.mrb[0].mxu0
        %v1527 = vadd.f32 0.0, %v1526
        %v1528 = vpop.f32.mrb[0].mxu0
        %v1529 = vpop.f32.mrb[0].mxu0
        %v1530 = vadd.f32 0.0, %v1529
        %v1531 = vpop.f32.mrb[0].mxu0
        %1532 = vdwg.mxu0
        %v1533 = vadd.f32 %v1267, %v1503
        %v1534 = vadd.f32 %v1268, %v1506
        %v1535 = vadd.f32 %v1269, %v1511
        %v1536 = vadd.f32 %v1270, %v1514
        %v1537 = vadd.f32 %v1271, %v1519
        %v1538 = vadd.f32 %v1272, %v1522
        %v1539 = vadd.f32 %v1273, %v1527
        %v1540 = vadd.f32 %v1274, %v1530
        %s1541 = scalar_lea.vmem %s4, 384
        %v1542 = vld [vmem:[%s1541] sm:$0xf]
        %v1543 = vld [vmem:[%s1541 + $0x4] sm:$0xf]
        %v1544 = vld [vmem:[%s1541 + $0x8] sm:$0xf]
        %v1545 = vld [vmem:[%s1541 + $0xc] sm:$0xf]
        %v1546 = vld [vmem:[%s1541 + $0x10] sm:$0xf]
        %v1547 = vld [vmem:[%s1541 + $0x14] sm:$0xf]
        %v1548 = vld [vmem:[%s1541 + $0x18] sm:$0xf]
        %v1549 = vld [vmem:[%s1541 + $0x1c] sm:$0xf]
        %v1550 = vld [vmem:[%s1541 + $0x20] sm:$0xf]
        %v1551 = vld [vmem:[%s1541 + $0x24] sm:$0xf]
        %v1552 = vld [vmem:[%s1541 + $0x28] sm:$0xf]
        %v1553 = vld [vmem:[%s1541 + $0x2c] sm:$0xf]
        %v1554 = vld [vmem:[%s1541 + $0x30] sm:$0xf]
        %v1555 = vld [vmem:[%s1541 + $0x34] sm:$0xf]
        %v1556 = vld [vmem:[%s1541 + $0x38] sm:$0xf]
        %v1557 = vld [vmem:[%s1541 + $0x3c] sm:$0xf]
        %v1559 = vunpack.c.l.b16 %v340
        %v1560 = vpack.c.b16 %v555, %v554
        %v1561 = vpack.c.b16 %v557, %v556
        %v1562 = vpack.c.b16 %v559, %v558
        %v1563 = vpack.c.b16 %v1559, %v560
        %v1584 = vunpack.c.l.b16 %v1542
        %v1585 = vunpack.c.l.b16 %v1543
        %v1586 = vunpack.c.l.b16 %v1544
        %v1587 = vunpack.c.l.b16 %v1545
        %v1588 = vunpack.c.l.b16 %v1546
        %v1589 = vunpack.c.l.b16 %v1547
        %v1590 = vunpack.c.l.b16 %v1548
        %v1591 = vunpack.c.l.b16 %v1549
        %v1592 = vunpack.c.l.b16 %v1550
        %v1593 = vunpack.c.l.b16 %v1551
        %v1594 = vunpack.c.l.b16 %v1552
        %v1595 = vunpack.c.l.b16 %v1553
        %v1596 = vunpack.c.l.b16 %v1554
        %v1597 = vunpack.c.l.b16 %v1555
        %v1598 = vunpack.c.l.b16 %v1556
        %v1599 = vunpack.c.l.b16 %v1557
        %v1600 = vpack.c.b16 %v1585, %v1584
        %v1601 = vpack.c.b16 %v1587, %v1586
        %v1602 = vpack.c.b16 %v1589, %v1588
        %v1603 = vpack.c.b16 %v1591, %v1590
        %v1604 = vpack.c.b16 %v1593, %v1592
        %v1605 = vpack.c.b16 %v1595, %v1594
        %v1606 = vpack.c.b16 %v1597, %v1596
        %v1607 = vpack.c.b16 %v1599, %v1598
        %1616 = vmatprep.subr.bf16.mxu0 0
        %1617 = vmatpush1.bf16.msra.mxu0 %v1600
        %1618 = vmatprep.subr.bf16.mxu0 0
        %1619 = vmatpush1.bf16.msra.mxu0 %v1601
        %1620 = vmatprep.subr.bf16.mxu0 0
        %1621 = vmatpush1.bf16.msra.mxu0 %v1602
        %1622 = vmatprep.subr.bf16.mxu0 0
        %1623 = vmatpush1.bf16.msra.mxu0 %v1603
        %1624 = vmatprep.subr.bf16.mxu0 0
        %1625 = vmatpush1.bf16.msra.mxu0 %v1604
        %1626 = vmatprep.subr.bf16.mxu0 0
        %1627 = vmatpush1.bf16.msra.mxu0 %v1605
        %1628 = vmatprep.subr.bf16.mxu0 0
        %1629 = vmatpush1.bf16.msra.mxu0 %v1606
        %1630 = vmatprep.subr.bf16.mxu0 0
        %1631 = vmatpush1.bf16.msra.mxu0 %v1607
        %1632 = vmatprep.subr.bf16.mxu0 0
        %1633 = vmatpush1.bf16.msra.mxu0 0
        %1634 = vmatprep.subr.bf16.mxu0 0
        %1635 = vmatpush1.bf16.msra.mxu0 0
        %1636 = vmatprep.subr.bf16.mxu0 0
        %1637 = vmatpush1.bf16.msra.mxu0 0
        %1638 = vmatprep.subr.bf16.mxu0 0
        %1639 = vmatpush1.bf16.msra.mxu0 0
        %1640 = vmatprep.subr.bf16.mxu0 0
        %1641 = vmatpush1.bf16.msra.mxu0 0
        %1642 = vmatprep.subr.bf16.mxu0 0
        %1643 = vmatpush1.bf16.msra.mxu0 0
        %1644 = vmatprep.subr.bf16.mxu0 0
        %1645 = vmatpush1.bf16.msra.mxu0 0
        %1646 = vmatprep.subr.bf16.mxu0 0
        %1647 = vmatpush1.bf16.msra.mxu0 0
        %1648 = vmatprep.mubr.bf16.mxu0 0
        %1649 = vmatmul.mubr.bf16.gmra.mrb[0].mxu0 %v1560
        %v1650 = vpop.f32.mrb[0].mxu0
        %v1651 = vadd.f32 0.0, %v1650
        %v1652 = vpop.f32.mrb[0].mxu0
        %v1653 = vpop.f32.mrb[0].mxu0
        %v1654 = vadd.f32 0.0, %v1653
        %v1655 = vpop.f32.mrb[0].mxu0
        %1656 = vmatprep.mubr.bf16.mxu0 0
        %1657 = vmatmul.mubr.bf16.gmra.mrb[0].mxu0 %v1561
        %v1658 = vpop.f32.mrb[0].mxu0
        %v1659 = vadd.f32 0.0, %v1658
        %v1660 = vpop.f32.mrb[0].mxu0
        %v1661 = vpop.f32.mrb[0].mxu0
        %v1662 = vadd.f32 0.0, %v1661
        %v1663 = vpop.f32.mrb[0].mxu0
        %1664 = vmatprep.mubr.bf16.mxu0 0
        %1665 = vmatmul.mubr.bf16.gmra.mrb[0].mxu0 %v1562
        %v1666 = vpop.f32.mrb[0].mxu0
        %v1667 = vadd.f32 0.0, %v1666
        %v1668 = vpop.f32.mrb[0].mxu0
        %v1669 = vpop.f32.mrb[0].mxu0
        %v1670 = vadd.f32 0.0, %v1669
        %v1671 = vpop.f32.mrb[0].mxu0
        %1672 = vmatprep.mubr.bf16.mxu0 0
        %1673 = vmatmul.mubr.bf16.gmra.mrb[0].mxu0 %v1563
        %v1674 = vpop.f32.mrb[0].mxu0
        %v1675 = vadd.f32 0.0, %v1674
        %v1676 = vpop.f32.mrb[0].mxu0
        %v1677 = vpop.f32.mrb[0].mxu0
        %v1678 = vadd.f32 0.0, %v1677
        %v1679 = vpop.f32.mrb[0].mxu0
        %1680 = vdwg.mxu0
        %v1681 = vadd.f32 %v1533, %v1651
        %v1682 = vadd.f32 %v1534, %v1654
        %v1683 = vadd.f32 %v1535, %v1659
        %v1684 = vadd.f32 %v1536, %v1662
        %v1685 = vadd.f32 %v1537, %v1667
        %v1686 = vadd.f32 %v1538, %v1670
        %v1687 = vadd.f32 %v1539, %v1675
        %v1688 = vadd.f32 %v1540, %v1678
        %s1689 = scalar_lea.vmem %s4, 448
        %v1690 = vld [vmem:[%s1689] sm:$0xf]
        %v1691 = vld [vmem:[%s1689 + $0x4] sm:$0xf]
        %v1692 = vld [vmem:[%s1689 + $0x8] sm:$0xf]
        %v1693 = vld [vmem:[%s1689 + $0xc] sm:$0xf]
        %v1694 = vld [vmem:[%s1689 + $0x10] sm:$0xf]
        %v1695 = vld [vmem:[%s1689 + $0x14] sm:$0xf]
        %v1696 = vld [vmem:[%s1689 + $0x18] sm:$0xf]
        %v1697 = vld [vmem:[%s1689 + $0x1c] sm:$0xf]
        %v1698 = vld [vmem:[%s1689 + $0x20] sm:$0xf]
        %v1699 = vld [vmem:[%s1689 + $0x24] sm:$0xf]
        %v1700 = vld [vmem:[%s1689 + $0x28] sm:$0xf]
        %v1701 = vld [vmem:[%s1689 + $0x2c] sm:$0xf]
        %v1702 = vld [vmem:[%s1689 + $0x30] sm:$0xf]
        %v1703 = vld [vmem:[%s1689 + $0x34] sm:$0xf]
        %v1704 = vld [vmem:[%s1689 + $0x38] sm:$0xf]
        %v1705 = vld [vmem:[%s1689 + $0x3c] sm:$0xf]
        %v1707 = vunpack.c.l.b16 %v350
        %v1708 = vpack.c.b16 %v418, %v417
        %v1709 = vpack.c.b16 %v420, %v419
        %v1710 = vpack.c.b16 %v422, %v421
        %v1711 = vpack.c.b16 %v1707, %v423
        %v1732 = vunpack.c.l.b16 %v1690
        %v1733 = vunpack.c.l.b16 %v1691
        %v1734 = vunpack.c.l.b16 %v1692
        %v1735 = vunpack.c.l.b16 %v1693
        %v1736 = vunpack.c.l.b16 %v1694
        %v1737 = vunpack.c.l.b16 %v1695
        %v1738 = vunpack.c.l.b16 %v1696
        %v1739 = vunpack.c.l.b16 %v1697
        %v1740 = vunpack.c.l.b16 %v1698
        %v1741 = vunpack.c.l.b16 %v1699
        %v1742 = vunpack.c.l.b16 %v1700
        %v1743 = vunpack.c.l.b16 %v1701
        %v1744 = vunpack.c.l.b16 %v1702
        %v1745 = vunpack.c.l.b16 %v1703
        %v1746 = vunpack.c.l.b16 %v1704
        %v1747 = vunpack.c.l.b16 %v1705
        %v1748 = vpack.c.b16 %v1733, %v1732
        %v1749 = vpack.c.b16 %v1735, %v1734
        %v1750 = vpack.c.b16 %v1737, %v1736
        %v1751 = vpack.c.b16 %v1739, %v1738
        %v1752 = vpack.c.b16 %v1741, %v1740
        %v1753 = vpack.c.b16 %v1743, %v1742
        %v1754 = vpack.c.b16 %v1745, %v1744
        %v1755 = vpack.c.b16 %v1747, %v1746
        %1764 = vmatprep.subr.bf16.mxu0 0
        %1765 = vmatpush1.bf16.msra.mxu0 %v1748
        %1766 = vmatprep.subr.bf16.mxu0 0
        %1767 = vmatpush1.bf16.msra.mxu0 %v1749
        %1768 = vmatprep.subr.bf16.mxu0 0
        %1769 = vmatpush1.bf16.msra.mxu0 %v1750
        %1770 = vmatprep.subr.bf16.mxu0 0
        %1771 = vmatpush1.bf16.msra.mxu0 %v1751
        %1772 = vmatprep.subr.bf16.mxu0 0
        %1773 = vmatpush1.bf16.msra.mxu0 %v1752
        %1774 = vmatprep.subr.bf16.mxu0 0
        %1775 = vmatpush1.bf16.msra.mxu0 %v1753
        %1776 = vmatprep.subr.bf16.mxu0 0
        %1777 = vmatpush1.bf16.msra.mxu0 %v1754
        %1778 = vmatprep.subr.bf16.mxu0 0
        %1779 = vmatpush1.bf16.msra.mxu0 %v1755
        %1780 = vmatprep.subr.bf16.mxu0 0
        %1781 = vmatpush1.bf16.msra.mxu0 0
        %1782 = vmatprep.subr.bf16.mxu0 0
        %1783 = vmatpush1.bf16.msra.mxu0 0
        %1784 = vmatprep.subr.bf16.mxu0 0
        %1785 = vmatpush1.bf16.msra.mxu0 0
        %1786 = vmatprep.subr.bf16.mxu0 0
        %1787 = vmatpush1.bf16.msra.mxu0 0
        %1788 = vmatprep.subr.bf16.mxu0 0
        %1789 = vmatpush1.bf16.msra.mxu0 0
        %1790 = vmatprep.subr.bf16.mxu0 0
        %1791 = vmatpush1.bf16.msra.mxu0 0
        %1792 = vmatprep.subr.bf16.mxu0 0
        %1793 = vmatpush1.bf16.msra.mxu0 0
        %1794 = vmatprep.subr.bf16.mxu0 0
        %1795 = vmatpush1.bf16.msra.mxu0 0
        %1796 = vmatprep.mubr.bf16.mxu0 0
        %1797 = vmatmul.mubr.bf16.gmra.mrb[0].mxu0 %v1708
        %v1798 = vpop.f32.mrb[0].mxu0
        %v1799 = vadd.f32 0.0, %v1798
        %v1800 = vpop.f32.mrb[0].mxu0
        %v1801 = vpop.f32.mrb[0].mxu0
        %v1802 = vadd.f32 0.0, %v1801
        %v1803 = vpop.f32.mrb[0].mxu0
        %1804 = vmatprep.mubr.bf16.mxu0 0
        %1805 = vmatmul.mubr.bf16.gmra.mrb[0].mxu0 %v1709
        %v1806 = vpop.f32.mrb[0].mxu0
        %v1807 = vadd.f32 0.0, %v1806
        %v1808 = vpop.f32.mrb[0].mxu0
        %v1809 = vpop.f32.mrb[0].mxu0
        %v1810 = vadd.f32 0.0, %v1809
        %v1811 = vpop.f32.mrb[0].mxu0
        %1812 = vmatprep.mubr.bf16.mxu0 0
        %1813 = vmatmul.mubr.bf16.gmra.mrb[0].mxu0 %v1710
        %v1814 = vpop.f32.mrb[0].mxu0
        %v1815 = vadd.f32 0.0, %v1814
        %v1816 = vpop.f32.mrb[0].mxu0
        %v1817 = vpop.f32.mrb[0].mxu0
        %v1818 = vadd.f32 0.0, %v1817
        %v1819 = vpop.f32.mrb[0].mxu0
        %1820 = vmatprep.mubr.bf16.mxu0 0
        %1821 = vmatmul.mubr.bf16.gmra.mrb[0].mxu0 %v1711
        %v1822 = vpop.f32.mrb[0].mxu0
        %v1823 = vadd.f32 0.0, %v1822
        %v1824 = vpop.f32.mrb[0].mxu0
        %v1825 = vpop.f32.mrb[0].mxu0
        %v1826 = vadd.f32 0.0, %v1825
        %v1827 = vpop.f32.mrb[0].mxu0
        %1828 = vdwg.mxu0
        %v1829 = vadd.f32 %v1681, %v1799
        %v1830 = vadd.f32 %v1682, %v1802
        %v1831 = vadd.f32 %v1683, %v1807
        %v1832 = vadd.f32 %v1684, %v1810
        %v1833 = vadd.f32 %v1685, %v1815
        %v1834 = vadd.f32 %v1686, %v1818
        %v1835 = vadd.f32 %v1687, %v1823
        %v1836 = vadd.f32 %v1688, %v1826
        %v1838 = vshrl.u32 %v340, 16
        %v1840 = vrot.slane %v1838, 4
        %v1841 = vshll.u32 %v340, 16
        %v1843 = vrot.slane %v1841, 5
        %v1844 = vor.u32 %v1840, %v1843
        %v1845 = vrot.slane %v1844, 4
        %v1847 = vshll.u32 %v341, 16
        %v1849 = vrot.slane %v1847, 5
        %v1850 = vsel %vm684, %v1845, %v1849
        %s1851 = scalar_lea.vmem %s4, 512
        %v1852 = vld [vmem:[%s1851] sm:$0xf]
        %v1853 = vld [vmem:[%s1851 + $0x4] sm:$0xf]
        %v1854 = vld [vmem:[%s1851 + $0x8] sm:$0xf]
        %v1855 = vld [vmem:[%s1851 + $0xc] sm:$0xf]
        %v1856 = vld [vmem:[%s1851 + $0x10] sm:$0xf]
        %v1857 = vld [vmem:[%s1851 + $0x14] sm:$0xf]
        %v1858 = vld [vmem:[%s1851 + $0x18] sm:$0xf]
        %v1859 = vld [vmem:[%s1851 + $0x1c] sm:$0xf]
        %v1860 = vld [vmem:[%s1851 + $0x20] sm:$0xf]
        %v1861 = vld [vmem:[%s1851 + $0x24] sm:$0xf]
        %v1862 = vld [vmem:[%s1851 + $0x28] sm:$0xf]
        %v1863 = vld [vmem:[%s1851 + $0x2c] sm:$0xf]
        %v1864 = vld [vmem:[%s1851 + $0x30] sm:$0xf]
        %v1865 = vld [vmem:[%s1851 + $0x34] sm:$0xf]
        %v1866 = vld [vmem:[%s1851 + $0x38] sm:$0xf]
        %v1867 = vld [vmem:[%s1851 + $0x3c] sm:$0xf]
        %v1868 = vunpack.c.l.b16 %v1850
        %v1869 = vpack.c.b16 %v816, %v815
        %v1870 = vpack.c.b16 %v818, %v817
        %v1871 = vpack.c.b16 %v820, %v819
        %v1872 = vpack.c.b16 %v1868, %v821
        %v1893 = vunpack.c.l.b16 %v1852
        %v1894 = vunpack.c.l.b16 %v1853
        %v1895 = vunpack.c.l.b16 %v1854
        %v1896 = vunpack.c.l.b16 %v1855
        %v1897 = vunpack.c.l.b16 %v1856
        %v1898 = vunpack.c.l.b16 %v1857
        %v1899 = vunpack.c.l.b16 %v1858
        %v1900 = vunpack.c.l.b16 %v1859
        %v1901 = vunpack.c.l.b16 %v1860
        %v1902 = vunpack.c.l.b16 %v1861
        %v1903 = vunpack.c.l.b16 %v1862
        %v1904 = vunpack.c.l.b16 %v1863
        %v1905 = vunpack.c.l.b16 %v1864
        %v1906 = vunpack.c.l.b16 %v1865
        %v1907 = vunpack.c.l.b16 %v1866
        %v1908 = vunpack.c.l.b16 %v1867
        %v1909 = vpack.c.b16 %v1894, %v1893
        %v1910 = vpack.c.b16 %v1896, %v1895
        %v1911 = vpack.c.b16 %v1898, %v1897
        %v1912 = vpack.c.b16 %v1900, %v1899
        %v1913 = vpack.c.b16 %v1902, %v1901
        %v1914 = vpack.c.b16 %v1904, %v1903
        %v1915 = vpack.c.b16 %v1906, %v1905
        %v1916 = vpack.c.b16 %v1908, %v1907
        %1925 = vmatprep.subr.bf16.mxu0 0
        %1926 = vmatpush1.bf16.msra.mxu0 %v1909
        %1927 = vmatprep.subr.bf16.mxu0 0
        %1928 = vmatpush1.bf16.msra.mxu0 %v1910
        %1929 = vmatprep.subr.bf16.mxu0 0
        %1930 = vmatpush1.bf16.msra.mxu0 %v1911
        %1931 = vmatprep.subr.bf16.mxu0 0
        %1932 = vmatpush1.bf16.msra.mxu0 %v1912
        %1933 = vmatprep.subr.bf16.mxu0 0
        %1934 = vmatpush1.bf16.msra.mxu0 %v1913
        %1935 = vmatprep.subr.bf16.mxu0 0
        %1936 = vmatpush1.bf16.msra.mxu0 %v1914
        %1937 = vmatprep.subr.bf16.mxu0 0
        %1938 = vmatpush1.bf16.msra.mxu0 %v1915
        %1939 = vmatprep.subr.bf16.mxu0 0
        %1940 = vmatpush1.bf16.msra.mxu0 %v1916
        %1941 = vmatprep.subr.bf16.mxu0 0
        %1942 = vmatpush1.bf16.msra.mxu0 0
        %1943 = vmatprep.subr.bf16.mxu0 0
        %1944 = vmatpush1.bf16.msra.mxu0 0
        %1945 = vmatprep.subr.bf16.mxu0 0
        %1946 = vmatpush1.bf16.msra.mxu0 0
        %1947 = vmatprep.subr.bf16.mxu0 0
        %1948 = vmatpush1.bf16.msra.mxu0 0
        %1949 = vmatprep.subr.bf16.mxu0 0
        %1950 = vmatpush1.bf16.msra.mxu0 0
        %1951 = vmatprep.subr.bf16.mxu0 0
        %1952 = vmatpush1.bf16.msra.mxu0 0
        %1953 = vmatprep.subr.bf16.mxu0 0
        %1954 = vmatpush1.bf16.msra.mxu0 0
        %1955 = vmatprep.subr.bf16.mxu0 0
        %1956 = vmatpush1.bf16.msra.mxu0 0
        %1957 = vmatprep.mubr.bf16.mxu0 0
        %1958 = vmatmul.mubr.bf16.gmra.mrb[0].mxu0 %v1869
        %v1959 = vpop.f32.mrb[0].mxu0
        %v1960 = vadd.f32 0.0, %v1959
        %v1961 = vpop.f32.mrb[0].mxu0
        %v1962 = vpop.f32.mrb[0].mxu0
        %v1963 = vadd.f32 0.0, %v1962
        %v1964 = vpop.f32.mrb[0].mxu0
        %1965 = vmatprep.mubr.bf16.mxu0 0
        %1966 = vmatmul.mubr.bf16.gmra.mrb[0].mxu0 %v1870
        %v1967 = vpop.f32.mrb[0].mxu0
        %v1968 = vadd.f32 0.0, %v1967
        %v1969 = vpop.f32.mrb[0].mxu0
        %v1970 = vpop.f32.mrb[0].mxu0
        %v1971 = vadd.f32 0.0, %v1970
        %v1972 = vpop.f32.mrb[0].mxu0
        %1973 = vmatprep.mubr.bf16.mxu0 0
        %1974 = vmatmul.mubr.bf16.gmra.mrb[0].mxu0 %v1871
        %v1975 = vpop.f32.mrb[0].mxu0
        %v1976 = vadd.f32 0.0, %v1975
        %v1977 = vpop.f32.mrb[0].mxu0
        %v1978 = vpop.f32.mrb[0].mxu0
        %v1979 = vadd.f32 0.0, %v1978
        %v1980 = vpop.f32.mrb[0].mxu0
        %1981 = vmatprep.mubr.bf16.mxu0 0
        %1982 = vmatmul.mubr.bf16.gmra.mrb[0].mxu0 %v1872
        %v1983 = vpop.f32.mrb[0].mxu0
        %v1984 = vadd.f32 0.0, %v1983
        %v1985 = vpop.f32.mrb[0].mxu0
        %v1986 = vpop.f32.mrb[0].mxu0
        %v1987 = vadd.f32 0.0, %v1986
        %v1988 = vpop.f32.mrb[0].mxu0
        %1989 = vdwg.mxu0
        %v1990 = vadd.f32 %v1829, %v1960
        %v1991 = vadd.f32 %v1830, %v1963
        %v1992 = vadd.f32 %v1831, %v1968
        %v1993 = vadd.f32 %v1832, %v1971
        %v1994 = vadd.f32 %v1833, %v1976
        %v1995 = vadd.f32 %v1834, %v1979
        %v1996 = vadd.f32 %v1835, %v1984
        %v1997 = vadd.f32 %v1836, %v1987
        %1998 = vst [vmem:[%s297] sm:$0xff] 0.0
        %v1999 = vadd.f32 %v1990, %v1991
        %v2000 = vadd.f32 %v1999, %v1992
        %v2001 = vadd.f32 %v2000, %v1993
        %v2002 = vadd.f32 %v2001, %v1994
        %v2003 = vadd.f32 %v2002, %v1995
        %v2004 = vadd.f32 %v2003, %v1996
        %v2005 = vadd.f32 %v2004, %v1997
        %v2006 = vrot.slane %v2005, 4
        %v2007 = vadd.f32 %v2005, %v2006
        %v2008 = vrot.slane %v2007, 2
        %v2009 = vadd.f32 %v2007, %v2008
        %v2010 = vrot.slane %v2009, 1
        %v2011 = vadd.f32 %v2009, %v2010
        %2012 = vst [vmem:[%s297] sm:$0x1] %v2011
        %v2013 = vmul.f32 %v1990, %v1990
        %v2014 = vmul.f32 %v1991, %v1991
        %v2015 = vmul.f32 %v1992, %v1992
        %v2016 = vmul.f32 %v1993, %v1993
        %v2017 = vmul.f32 %v1994, %v1994
        %v2018 = vmul.f32 %v1995, %v1995
        %v2019 = vmul.f32 %v1996, %v1996
        %v2020 = vmul.f32 %v1997, %v1997
        %v2021 = vadd.f32 %v2013, %v2014
        %v2022 = vadd.f32 %v2021, %v2015
        %v2023 = vadd.f32 %v2022, %v2016
        %v2024 = vadd.f32 %v2023, %v2017
        %v2025 = vadd.f32 %v2024, %v2018
        %v2026 = vadd.f32 %v2025, %v2019
        %v2027 = vadd.f32 %v2026, %v2020
        %v2028 = vrot.slane %v2027, 4
        %v2029 = vadd.f32 %v2027, %v2028
        %v2030 = vrot.slane %v2029, 2
        %v2031 = vadd.f32 %v2029, %v2030
        %v2032 = vrot.slane %v2031, 1
        %v2033 = vadd.f32 %v2031, %v2032
        %2034 = vst [vmem:[%s297 + $0x1] sm:$0x1] %v2033
        %v2035 = vpack.c.bf16 %v1990, %v1990
        %v2036 = vpack.c.bf16 %v1991, %v1991
        %v2037 = vpack.c.bf16 %v1992, %v1992
        %v2038 = vpack.c.bf16 %v1993, %v1993
        %v2039 = vpack.c.bf16 %v1994, %v1994
        %v2040 = vpack.c.bf16 %v1995, %v1995
        %v2041 = vpack.c.bf16 %v1996, %v1996
        %v2042 = vpack.c.bf16 %v1997, %v1997
        %2043 = vst [vmem:[%s322] sm:$0xf] 0
        %2044 = vst [vmem:[%s322 + $0x4] sm:$0x1] 0
        %2045 = vst [vmem:[%s322 + $0x8] sm:$0xf] 0
        %2046 = vst [vmem:[%s322 + $0xc] sm:$0x1] 0
        %2047 = vst [vmem:[%s322 + $0x10] sm:$0xf] 0
        %2048 = vst [vmem:[%s322 + $0x14] sm:$0x1] 0
        %2049 = vst [vmem:[%s322 + $0x18] sm:$0xf] 0
        %2050 = vst [vmem:[%s322 + $0x1c] sm:$0x1] 0
        %2051 = vst [vmem:[%s322 + $0x20] sm:$0xf] 0
        %2052 = vst [vmem:[%s322 + $0x24] sm:$0x1] 0
        %2053 = vst [vmem:[%s322 + $0x28] sm:$0xf] 0
        %2054 = vst [vmem:[%s322 + $0x2c] sm:$0x1] 0
        %2055 = vst [vmem:[%s322 + $0x30] sm:$0xf] 0
        %2056 = vst [vmem:[%s322 + $0x34] sm:$0x1] 0
        %2057 = vst [vmem:[%s322 + $0x38] sm:$0xf] 0
        %2058 = vst [vmem:[%s322 + $0x3c] sm:$0x1] 0
        %2059 = vst [vmem:[%s322 + $0x40] sm:$0xf] 0
        %2060 = vst [vmem:[%s322 + $0x44] sm:$0x1] 0
        %2061 = vst [vmem:[%s322 + $0x48] sm:$0xf] 0
        %2062 = vst [vmem:[%s322 + $0x4c] sm:$0x1] 0
        %v2071 = vunpack.c.l.b16 %v2035
        %v2072 = vunpack.c.l.b16 %v2036
        %v2073 = vunpack.c.l.b16 %v2037
        %v2074 = vunpack.c.l.b16 %v2038
        %v2075 = vunpack.c.l.b16 %v2039
        %v2076 = vunpack.c.l.b16 %v2040
        %v2077 = vunpack.c.l.b16 %v2041
        %v2078 = vunpack.c.l.b16 %v2042
        %v2079 = vpack.c.b16 %v2071, %v2071
        %v2080 = vpack.c.b16 %v2072, %v2072
        %v2081 = vpack.c.b16 %v2073, %v2073
        %v2082 = vpack.c.b16 %v2074, %v2074
        %v2083 = vpack.c.b16 %v2075, %v2075
        %v2084 = vpack.c.b16 %v2076, %v2076
        %v2085 = vpack.c.b16 %v2077, %v2077
        %v2086 = vpack.c.b16 %v2078, %v2078
        %v2088 = vshrl.u32 %v2079, 16
        %v2090 = vrot.slane %v2088, 7
        %v2091 = vshll.u32 %v2079, 16
        %v2093 = vor.u32 %v2090, %v2091
        %v2094 = vrot.slane %v2090, 4
        %v2096 = vshrl.u32 %v2080, 16
        %v2098 = vrot.slane %v2096, 7
        %v2099 = vshll.u32 %v2080, 16
        %v2101 = vor.u32 %v2098, %v2099
        %v2102 = vrot.slane %v2098, 4
        %v2104 = vshrl.u32 %v2081, 16
        %v2106 = vrot.slane %v2104, 7
        %v2107 = vshll.u32 %v2081, 16
        %v2109 = vor.u32 %v2106, %v2107
        %v2110 = vrot.slane %v2106, 4
        %v2112 = vshrl.u32 %v2082, 16
        %v2114 = vrot.slane %v2112, 7
        %v2115 = vshll.u32 %v2082, 16
        %v2117 = vor.u32 %v2114, %v2115
        %v2118 = vrot.slane %v2114, 4
        %v2120 = vshrl.u32 %v2083, 16
        %v2122 = vrot.slane %v2120, 7
        %v2123 = vshll.u32 %v2083, 16
        %v2125 = vor.u32 %v2122, %v2123
        %v2126 = vrot.slane %v2122, 4
        %v2128 = vshrl.u32 %v2084, 16
        %v2130 = vrot.slane %v2128, 7
        %v2131 = vshll.u32 %v2084, 16
        %v2133 = vor.u32 %v2130, %v2131
        %v2134 = vrot.slane %v2130, 4
        %v2136 = vshrl.u32 %v2085, 16
        %v2138 = vrot.slane %v2136, 7
        %v2139 = vshll.u32 %v2085, 16
        %v2141 = vor.u32 %v2138, %v2139
        %v2142 = vrot.slane %v2138, 4
        %v2144 = vshrl.u32 %v2086, 16
        %v2146 = vrot.slane %v2144, 7
        %v2147 = vshll.u32 %v2086, 16
        %v2149 = vor.u32 %v2146, %v2147
        %v2150 = vrot.slane %v2146, 4
        %s2167 = scalar_lea.vmem %s322, 8
        %vm2168 = vcmask 1043456
        %vm2169 = vsmask.f32 7938
        %vm2170 = vmand %vm2168, %vm2169
        %v2171 = vld [vmem:[%s2167] sm:$0xf]
        %v2172 = vsel %vm2170, %v2093, %v2171
        %2173 = vst [vmem:[%s2167] sm:$0xf] %v2172
        %vm2174 = vcmask 1040384
        %vm2175 = vsmask.f32 256
        %vm2176 = vmand %vm2174, %vm2175
        %v2177 = vld [vmem:[%s2167 + $0x4] sm:$0x1]
        %v2178 = vsel %vm2176, %v2094, %v2177
        %2179 = vst [vmem:[%s2167 + $0x4] sm:$0x1] %v2178
        %v2180 = vld [vmem:[%s2167 + $0x8] sm:$0xf]
        %v2181 = vsel %vm2170, %v2101, %v2180
        %2182 = vst [vmem:[%s2167 + $0x8] sm:$0xf] %v2181
        %v2183 = vld [vmem:[%s2167 + $0xc] sm:$0x1]
        %v2184 = vsel %vm2176, %v2102, %v2183
        %2185 = vst [vmem:[%s2167 + $0xc] sm:$0x1] %v2184
        %v2186 = vld [vmem:[%s2167 + $0x10] sm:$0xf]
        %v2187 = vsel %vm2170, %v2109, %v2186
        %2188 = vst [vmem:[%s2167 + $0x10] sm:$0xf] %v2187
        %v2189 = vld [vmem:[%s2167 + $0x14] sm:$0x1]
        %v2190 = vsel %vm2176, %v2110, %v2189
        %2191 = vst [vmem:[%s2167 + $0x14] sm:$0x1] %v2190
        %v2192 = vld [vmem:[%s2167 + $0x18] sm:$0xf]
        %v2193 = vsel %vm2170, %v2117, %v2192
        %2194 = vst [vmem:[%s2167 + $0x18] sm:$0xf] %v2193
        %v2195 = vld [vmem:[%s2167 + $0x1c] sm:$0x1]
        %v2196 = vsel %vm2176, %v2118, %v2195
        %2197 = vst [vmem:[%s2167 + $0x1c] sm:$0x1] %v2196
        %v2198 = vld [vmem:[%s2167 + $0x20] sm:$0xf]
        %v2199 = vsel %vm2170, %v2125, %v2198
        %2200 = vst [vmem:[%s2167 + $0x20] sm:$0xf] %v2199
        %v2201 = vld [vmem:[%s2167 + $0x24] sm:$0x1]
        %v2202 = vsel %vm2176, %v2126, %v2201
        %2203 = vst [vmem:[%s2167 + $0x24] sm:$0x1] %v2202
        %v2204 = vld [vmem:[%s2167 + $0x28] sm:$0xf]
        %v2205 = vsel %vm2170, %v2133, %v2204
        %2206 = vst [vmem:[%s2167 + $0x28] sm:$0xf] %v2205
        %v2207 = vld [vmem:[%s2167 + $0x2c] sm:$0x1]
        %v2208 = vsel %vm2176, %v2134, %v2207
        %2209 = vst [vmem:[%s2167 + $0x2c] sm:$0x1] %v2208
        %v2210 = vld [vmem:[%s2167 + $0x30] sm:$0xf]
        %v2211 = vsel %vm2170, %v2141, %v2210
        %2212 = vst [vmem:[%s2167 + $0x30] sm:$0xf] %v2211
        %v2213 = vld [vmem:[%s2167 + $0x34] sm:$0x1]
        %v2214 = vsel %vm2176, %v2142, %v2213
        %2215 = vst [vmem:[%s2167 + $0x34] sm:$0x1] %v2214
        %v2216 = vld [vmem:[%s2167 + $0x38] sm:$0xf]
        %v2217 = vsel %vm2170, %v2149, %v2216
        %2218 = vst [vmem:[%s2167 + $0x38] sm:$0xf] %v2217
        %v2219 = vld [vmem:[%s2167 + $0x3c] sm:$0x1]
        %v2220 = vsel %vm2176, %v2150, %v2219
        %2221 = vst [vmem:[%s2167 + $0x3c] sm:$0x1] %v2220
        %p2222 = scmp.lt.s32.totalorder %s21, 1
        %s2223 = scalar_select %p2222, %s21, 1
        %s2224 = smul.addr %s2223, 20
        %s2225 = smul.addr %s2224, 4
        %s2226 = scalar_lea.vmem %s5, %s2225
        %s2227 = sand.u32 %s180, 1
        %s2228 = scalar_lea.sflag [#allocation3], %s2227
        %s2229 = sand.u32 %s180, 1
        %s2230 = smul.addr %s2229, 8
        %s2231 = scalar_lea.vmem [#allocation2], %s2230
        // Predicated region
        $region41: #{tpu_custom_call.1} parent=39 // pred_check
          %p2232 = pneg %p164
        $region42: #{tpu_custom_call.1} parent=39 // pred_check_branch
          %2234 = sbr.rel (%p2232) target = $region44
        $region43: #{tpu_custom_call.1} parent=39 // pred_region
          _
        $region44: #{tpu_custom_call.1} parent=39 // pred_fallthru
          _
        // Predicated region
        $region45: #{tpu_custom_call.1} parent=39 // pred_check
          %p2235 = pneg %p190
        $region46: #{tpu_custom_call.1} parent=39 // pred_check_branch
          %2237 = sbr.rel (%p2235) target = $region48
        $region47: #{tpu_custom_call.1} parent=39 // pred_region
          %s2239 = ssub.s32 128, 128
          %2240 = vsyncadd %s2228, %s2239
          %s2241 = smul.addr %s21, 128
          %s2242 = scalar_lea.hbm %s6, %s2241
          %s2244 = sshll.u32 %s2231, 4
          %s2245 = int_to_ptr.vmem [resolvable:$true] %s2244
          %2247 = dma.vmem_to_hbm [thread:$0]  %s2245, 128, %s2242, %s2228
        $region48: #{tpu_custom_call.1} parent=39 // pred_fallthru
          _
      $region40: #{tpu_custom_call.1} parent=5 // pred_fallthru
        _
      %p2248 = scmp.le.s32.totalorder 2, %s16
      // Predicated region
      $region49: #{tpu_custom_call.1} parent=5 // pred_check
        %p2249 = pneg %p2248
      $region50: #{tpu_custom_call.1} parent=5 // pred_check_branch
        %2251 = sbr.rel (%p2249) target = $region52
      $region51: #{tpu_custom_call.1} parent=5 // pred_region
        %s2252 = ssub.s32 %s16, 2
        // Predicated region
        $region53: #{tpu_custom_call.1} parent=51 // pred_check
          %p2253 = pneg %p170
        $region54: #{tpu_custom_call.1} parent=51 // pred_check_branch
          %2255 = sbr.rel (%p2253) target = $region56
        $region55: #{tpu_custom_call.1} parent=51 // pred_region
          %p2256 = scmp.lt.s32.totalorder %s22, 1
          %s2257 = scalar_select %p2256, %s22, 1
          %s2258 = smul.addr %s2257, 20
          %s2259 = smul.addr %s2258, 4
          %s2260 = scalar_lea.vmem %s5, %s2259
        $region56: #{tpu_custom_call.1} parent=51 // pred_fallthru
          _
        // Predicated region
        $region57: #{tpu_custom_call.1} parent=51 // pred_check
          %p2261 = pneg %p196
        $region58: #{tpu_custom_call.1} parent=51 // pred_check_branch
          %2263 = sbr.rel (%p2261) target = $region60
        $region59: #{tpu_custom_call.1} parent=51 // pred_region
          %s2264 = sand.u32 %s181, 1
          %s2265 = scalar_lea.sflag [#allocation3], %s2264
          %s2266 = sand.u32 %s181, 1
          %s2267 = smul.addr %s2266, 8
          %s2268 = scalar_lea.vmem [#allocation2], %s2267
          %2269 = dma.done %s2265, 128
        $region60: #{tpu_custom_call.1} parent=51 // pred_fallthru
          _
      $region52: #{tpu_custom_call.1} parent=5 // pred_fallthru
        _
    $region6: #{tpu_custom_call.1} parent=1 // loop_footer
      %s20 = sadd.s32 1, %s16
    $region7: #{tpu_custom_call.1} parent=1 // loop_footer_branch
      %15 = sbr.rel target = $region3
    $region8: #{tpu_custom_call.1} parent=1 // loop_exit
      _
    %2270 = vsyncpa [#allocation3], 1
    %s2271 = scalar_lea.sflag [#allocation3], 1
    %2272 = vsyncpa %s2271, 1

</llo_original>
